<compile_context>
chip_gen: v6e
topology: v6e:2x2x1
jax: 0.10.0
libtpu: 0.0.40
codegen_flags: <defaults>
</compile_context>

<pallas_src>
import functools

import jax
import jax.numpy as jnp
from jax import lax
from jax.experimental import pallas as pl
from jax.experimental.pallas import tpu as pltpu


def _round_up(a: int, b: int) -> int:
    return (a + b - 1) // b * b


def _pick_chunk(total: int, cap: int) -> int:
    """Largest 'nice' chunk <= cap that divides total (total is a mult. of 8)."""
    for cand in (cap, 512, 256, 128, 64, 32, 16, 8):
        if cand <= cap and total % cand == 0:
            return cand
    return total


def _attn_ds_kernel(x_ref, wv_ref, wq_ref, wp_ref, bp_ref, o_ref,
                    v_s, s_s, pooled_s,
                    *, N, C, nh, wb, row_chunk, win_chunk, c_chunk):
    """One grid step = wb windows of N tokens each (token-major layout).

    x_ref    : (N, wb, C)     bf16  spatial tokens, token-major
    wv_ref   : (C, C)         bf16  v weight (output channels permuted)
    wq_ref   : (C, SP)        bf16  q-folded k weight, zero-padded to SP lanes
    wp_ref   : (C, C)         bf16  proj weight (rows permuted to match v)
    bp_ref   : (1, C)         f32   proj bias (+ folded v bias)
    o_ref    : (wb, C)              pooled + projected output per window
    v_s      : (N*wb, C)      bf16  VMEM scratch: v, token-major
    s_s      : (N*wb, SP)     f32   VMEM scratch: per-head attention scores
    pooled_s : (win_chunk, C) bf16  VMEM scratch (only used when C is tiled)
    """
    # ---- Phase 1: v / score projections, streamed in big row chunks --------
    def p1_body(ci, carry):
        r0 = pl.multiple_of(ci * row_chunk, row_chunk)
        for n in range(N):                       # N is small; keep unrolled
            xc = x_ref[n, pl.ds(r0, row_chunk), :]
            sl = pl.ds(n * wb + r0, row_chunk)
            v_s[sl, :] = jnp.dot(
                xc, wv_ref[...],
                preferred_element_type=jnp.float32).astype(v_s.dtype)
            s_s[sl, :] = jnp.dot(
                xc, wq_ref[...], preferred_element_type=jnp.float32)
        return carry

    lax.fori_loop(0, wb // row_chunk, p1_body, 0)

    # ---- Phase 2: per-window softmax over N tokens + pooling + projection --
    n_c_chunks = C // c_chunk

    def p2_body(wi, carry):
        w0 = pl.multiple_of(wi * win_chunk, win_chunk)

        def scores(n):                           # (win_chunk, nh) f32
            return s_s[pl.ds(n * wb + w0, win_chunk), pl.ds(0, nh)]

        # per-window, per-head softmax stabilizer + denominator
        m = scores(0)
        for n in range(1, N):
            m = jnp.maximum(m, scores(n))
        denom = jnp.zeros((win_chunk, nh), jnp.float32)
        for n in range(N):
            denom = denom + jnp.exp(scores(n) - m)
        inv = pl.reciprocal(denom, approx=True)

        # weighted pooling of v, C-tiled so the accumulator stays in vregs.
        # Channel j of the permuted v layout belongs to head j % nh, so the
        # per-head weights expand to channels with a cheap lane tile.
        def pooled_chunk(c0, csz):
            acc = jnp.zeros((win_chunk, csz), jnp.float32)
            for n in range(N):
                w = jnp.exp(scores(n) - m) * inv          # (win_chunk, nh)
                v = v_s[pl.ds(n * wb + w0, win_chunk), pl.ds(c0, csz)]
                acc = acc + jnp.tile(w, (1, csz // nh)) * v.astype(jnp.float32)
            return acc

        if n_c_chunks == 1:
            pooled = pooled_chunk(0, C).astype(jnp.bfloat16)
        else:
            for c0 in range(0, C, c_chunk):
                pooled_s[:, pl.ds(c0, c_chunk)] = (
                    pooled_chunk(c0, c_chunk).astype(pooled_s.dtype))
            pooled = pooled_s[...]

        y = (jnp.dot(pooled, wp_ref[...], preferred_element_type=jnp.float32)
             + bp_ref[...])
        o_ref[pl.ds(w0, win_chunk), :] = y.astype(o_ref.dtype)
        return carry

    lax.fori_loop(0, wb // win_chunk, p2_body, 0)


def attn_downsample(x, twod_shape, params, *, window_size, num_heads, wb=512):
    """Pallas implementation of AttnDownsample.forward.

    x: (B, T, C) with the last H*W tokens spatial (row-major).
    Returns (B, T - H*W + (H//ws)*(W//ws), C).
    """
    B, T, C = x.shape
    H, W = twod_shape
    ws = window_size
    ntok = H * W
    dsh, dsw = H // ws, W // ws
    N = ws * ws
    nh = num_heads
    hd = C // nh
    scale = hd ** (-0.5)
    assert nh * hd == C and dsh * ws == H and dsw * ws == W

    Bw = B * dsh * dsw
    x_pre = x[:, : T - ntok]

    # ---- Host glue: bf16 cast + token-major window rearrange ---------------
    # (N, Bw, C): token n of window w lives at [n, w, :], so every per-token
    # access inside the kernel is a dense (win_chunk, C) block.
    x_spat = x[:, T - ntok:].astype(jnp.bfloat16)
    x_spat = x_spat.reshape(B, dsh, ws, dsw, ws, C)
    x_tm = x_spat.transpose(2, 4, 0, 1, 3, 5).reshape(N, Bw, C)

    # ---- Block sizing -------------------------------------------------------
    SP = _round_up(max(nh, 128), 128)               # padded score lanes
    out_bytes = jnp.dtype(x.dtype).itemsize

    # prefer >=4 grid steps (pipeline overlap / 2 per TC on v7x), no >=128 clamp
    wb_eff = min(wb, _round_up(Bw, 8),
                 max(8, _round_up(pl.cdiv(Bw, 4), 8)))

    def footprint(wbe, wc):
        x_blk = N * wbe * C * 2
        o_blk = wbe * C * out_bytes
        wts = 2 * C * C * 2 + C * SP * 2 + C * 4
        scr = N * wbe * C * 2 + N * wbe * SP * 4 + wc * C * 2
        return 2 * (x_blk + o_blk) + 2 * wts + scr

    # keep the VMEM footprint v7x-safe (64 MiB physical)
    while wb_eff > 8 and footprint(wb_eff, min(wb_eff, 128)) > (48 << 20):
        wb_eff = max(8, _round_up(wb_eff // 2, 8))

    Bw_pad = _round_up(Bw, wb_eff)
    if Bw_pad != Bw:
        x_tm = jnp.pad(x_tm, ((0, 0), (0, Bw_pad - Bw), (0, 0)))

    row_chunk = _pick_chunk(wb_eff, 256)
    # C tiling so the (win_chunk, c_chunk) f32 accumulator stays in vregs
    if C <= 512:
        c_chunk = C
    elif C % 256 == 0:
        c_chunk = 256
    elif C % 128 == 0:
        c_chunk = 128
    else:
        c_chunk = C
    if c_chunk % nh != 0:
        c_chunk = C
    wc_cap = max(8, min(128, ((64 * 1024) // (c_chunk * 4)) // 8 * 8))
    win_chunk = _pick_chunk(wb_eff, wc_cap)

    # ---- Host glue: fold q into the k weight, permute channels, fold biases -
    q = params["q"].astype(jnp.float32)                  # (1, nh, 1, hd)
    Wkv = params["kv_w"].astype(jnp.float32)             # (2C, C)
    bkv = params["kv_b"].astype(jnp.float32)             # (2C,)
    Wp = params["proj_w"].astype(jnp.float32)            # (C, C)
    bp = params["proj_b"].astype(jnp.float32)            # (C,)

    Wk, Wv = Wkv[:C], Wkv[C:]
    bv = bkv[C:]

    q_scaled = q[0, :, 0, :] * scale                     # (nh, hd)
    wq_eff = jnp.einsum('hdc,hd->ch', Wk.reshape(nh, hd, C), q_scaled)  # (C,nh)
    wq_pad = jnp.zeros((C, SP), jnp.float32).at[:, :nh].set(wq_eff)
    wq_pad = wq_pad.astype(jnp.bfloat16)

    # Channel permutation: permuted channel j belongs to head j % nh, matching
    # the lane-tile expansion of the per-head softmax weights.
    j = jnp.arange(C)
    perm = (j % nh) * hd + (j // nh)

    wv_t_perm = jnp.take(Wv.T, perm, axis=1).astype(jnp.bfloat16)   # (C, C)
    wp_t_perm_f32 = jnp.take(Wp.T, perm, axis=0)                    # (C, C)
    bv_perm = jnp.take(bv, perm)
    # softmax weights sum to 1 per head, so bv can be added after pooling and
    # then folded straight into the projection bias.
    bp_eff = (bp + bv_perm @ wp_t_perm_f32).reshape(1, C).astype(jnp.float32)
    wp_t_perm = wp_t_perm_f32.astype(jnp.bfloat16)

    kernel = functools.partial(
        _attn_ds_kernel, N=N, C=C, nh=nh, wb=wb_eff,
        row_chunk=row_chunk, win_chunk=win_chunk, c_chunk=c_chunk)

    grid = (Bw_pad // wb_eff,)
    vmem_limit = int(min(max(footprint(wb_eff, win_chunk) * 5 // 4 + (8 << 20),
                             32 << 20), 100 << 20))

    pooled = pl.pallas_call(
        kernel,
        out_shape=jax.ShapeDtypeStruct((Bw_pad, C), x.dtype),
        grid_spec=pltpu.PrefetchScalarGridSpec(
            num_scalar_prefetch=0,
            grid=grid,
            in_specs=[
                pl.BlockSpec((N, wb_eff, C), lambda i: (0, i, 0)),
                pl.BlockSpec((C, C), lambda i: (0, 0)),
                pl.BlockSpec((C, SP), lambda i: (0, 0)),
                pl.BlockSpec((C, C), lambda i: (0, 0)),
                pl.BlockSpec((1, C), lambda i: (0, 0)),
            ],
            out_specs=pl.BlockSpec((wb_eff, C), lambda i: (i, 0)),
            scratch_shapes=[
                pltpu.VMEM((N * wb_eff, C), jnp.bfloat16),      # v
                pltpu.VMEM((N * wb_eff, SP), jnp.float32),      # scores
                pltpu.VMEM((win_chunk, C), jnp.bfloat16),       # pooled (C-tiled)
            ]),
        compiler_params=pltpu.CompilerParams(
            dimension_semantics=("parallel",),
            vmem_limit_bytes=vmem_limit),
    )(x_tm, wv_t_perm, wq_pad, wp_t_perm, bp_eff)

    # Drop padded windows; '(b h w) c -> b (h w) c'; concat the prefix tokens.
    y = pooled[:Bw].reshape(B, dsh * dsw, C)
    return jnp.concatenate([x_pre, y], axis=1)


def attn_downsample_reference(x, twod_shape, params, *, window_size, num_heads):
    """Pure-JAX reference mirroring the PyTorch forward exactly (f32)."""
    B, T, C = x.shape
    H, W = twod_shape
    ws = window_size
    ntok = H * W
    dsh, dsw = H // ws, W // ws
    nh = num_heads
    hd = C // nh
    scale = hd ** (-0.5)

    x_pre = x[:, : T - ntok]
    x_spat = x[:, T - ntok:].reshape(B, dsh, ws, dsw, ws, C)
    x_spat = x_spat.transpose(0, 1, 3, 2, 4, 5).reshape(B * dsh * dsw, ws * ws, C)
    Bw, N, _ = x_spat.shape

    kv = x_spat @ params["kv_w"].T + params["kv_b"]          # (Bw, N, 2C)
    kv = kv.reshape(Bw, N, 2, nh, hd).transpose(2, 0, 3, 1, 4)
    k, v = kv[0], kv[1]                                      # (Bw, nh, N, hd)
    q = jnp.broadcast_to(params["q"] * scale, (Bw, nh, 1, hd))
    attn = jnp.einsum('bhqd,bhnd->bhqn', q, k)
    attn = jax.nn.softmax(attn, axis=-1)
    out = jnp.einsum('bhqn,bhnd->bhqd', attn, v)             # (Bw, nh, 1, hd)
    out = out.transpose(0, 2, 1, 3).reshape(Bw, C)
    y = out @ params["proj_w"].T + params["proj_b"]
    y = y.reshape(B, dsh * dsw, C)
    return jnp.concatenate([x_pre, y], axis=1)


if __name__ == "__main__":
    # Small config consistent with the module: dim a multiple of num_heads,
    # spatial side a multiple of window_size.
    dim = 128
    num_heads = 16
    head_dim = dim // num_heads
    window_size = 2
    B = 2
    H = W = 8
    n_prefix = 4                      # non-spatial prefix tokens (cls/reg)
    T = n_prefix + H * W

    key = jax.random.PRNGKey(0)
    kq, kkw, kkb, kpw, kpb, kx = jax.random.split(key, 6)
    params = {
        "q": 0.01 * jax.random.normal(kq, (1, num_heads, 1, head_dim),
                                      jnp.float32),
        "kv_w": 0.02 * jax.random.normal(kkw, (2 * dim, dim), jnp.float32),
        "kv_b": 0.02 * jax.random.normal(kkb, (2 * dim,), jnp.float32),
        "proj_w": 0.02 * jax.random.normal(kpw, (dim, dim), jnp.float32),
        "proj_b": 0.02 * jax.random.normal(kpb, (dim,), jnp.float32),
    }
    x = jax.random.normal(kx, (B, T, dim), jnp.float32)

    run = jax.jit(functools.partial(attn_downsample, window_size=window_size,
                                    num_heads=num_heads, wb=512),
                  static_argnums=(1,))
    out = run(x, (H, W), params)
    out = jax.block_until_ready(out)

    ref = attn_downsample_reference(x, (H, W), params,
                                    window_size=window_size,
                                    num_heads=num_heads)
    assert out.shape == (B, n_prefix + (H // window_size) * (W // window_size),
                         dim), out.shape
    max_err = float(jnp.max(jnp.abs(out - ref)))
    # bf16 MXU operands / bf16 v staging + approx reciprocal loosen the
    # tolerance vs pure f32.
    assert jnp.allclose(out, ref, atol=1e-2, rtol=1e-2), max_err
    print("KERNEL_OK")
</pallas_src>

<mosaic_0001>
module attributes {stable_mosaic.version = 11 : i64} {
  func.func @_attn_ds_kernel(%arg0: i32, %arg1: memref<4x8x128xbf16, #tpu.memory_space<vmem>>, %arg2: memref<128x128xbf16, #tpu.memory_space<vmem>>, %arg3: memref<128x128xbf16, #tpu.memory_space<vmem>>, %arg4: memref<128x128xbf16, #tpu.memory_space<vmem>>, %arg5: memref<1x128xf32, #tpu.memory_space<vmem>>, %arg6: memref<8x128xf32, #tpu.memory_space<vmem>>, %arg7: memref<32x128xbf16, #tpu.memory_space<vmem>>, %arg8: memref<32x128xf32, #tpu.memory_space<vmem>>, %arg9: memref<8x128xbf16, #tpu.memory_space<vmem>>) attributes {dimension_semantics = [#tpu.dimension_semantics<parallel>], iteration_bounds = array<i64: 4>, scalar_prefetch = 0 : i64, scratch_operands = 3 : i64, tpu.core_type = #tpu.core_type<tc>, window_params = [{transform_indices = @transform_0, window_bounds = array<i64: 4, 8, 128>}, {pipeline_mode = #tpu.pipeline_mode<synchronous>, transform_indices = @transform_1, window_bounds = array<i64: 128, 128>}, {pipeline_mode = #tpu.pipeline_mode<synchronous>, transform_indices = @transform_2, window_bounds = array<i64: 128, 128>}, {pipeline_mode = #tpu.pipeline_mode<synchronous>, transform_indices = @transform_3, window_bounds = array<i64: 128, 128>}, {pipeline_mode = #tpu.pipeline_mode<synchronous>, transform_indices = @transform_4, window_bounds = array<i64: 1, 128>}, {transform_indices = @transform_5, window_bounds = array<i64: 8, 128>}]} {
    %c0_i32 = arith.constant 0 : i32
    %c8_i32 = arith.constant 8 : i32
    %0 = arith.muli %c0_i32, %c8_i32 : i32
    %1 = tpu.assume_multiple %0, 8 : i32
    %c0 = arith.constant 0 : index
    %2 = arith.index_cast %1 : i32 to index
    %c0_0 = arith.constant 0 : index
    %3 = vector.load %arg1[%c0, %2, %c0_0] : memref<4x8x128xbf16, #tpu.memory_space<vmem>>, vector<1x8x128xbf16>
    %4 = vector.shape_cast %3 : vector<1x8x128xbf16> to vector<8x128xbf16>
    %c0_i32_1 = arith.constant 0 : i32
    %5 = arith.addi %c0_i32_1, %1 : i32
    %c0_2 = arith.constant 0 : index
    %c0_3 = arith.constant 0 : index
    %6 = vector.load %arg2[%c0_2, %c0_3] : memref<128x128xbf16, #tpu.memory_space<vmem>>, vector<128x128xbf16>
    %cst = arith.constant dense<0.000000e+00> : vector<8x128xf32>
    %7 = tpu.matmul %4, %6, %cst {dimension_numbers = #tpu.dot_dimension_numbers<[1], [0], [0], [1], [0, 0, 1, 1], [], []>} : vector<8x128xbf16>, vector<128x128xbf16>, vector<8x128xf32> -> vector<8x128xf32>
    %8 = arith.truncf %7 : vector<8x128xf32> to vector<8x128xbf16>
    %9 = arith.index_cast %5 : i32 to index
    %c0_4 = arith.constant 0 : index
    %10 = vector.load %arg7[%9, %c0_4] : memref<32x128xbf16, #tpu.memory_space<vmem>>, vector<8x128xbf16>
    tpu.vector_store %arg7[%9, %c0_4], %8 {strides = array<i32>} : memref<32x128xbf16, #tpu.memory_space<vmem>>, vector<8x128xbf16>,
    %c0_5 = arith.constant 0 : index
    %c0_6 = arith.constant 0 : index
    %11 = vector.load %arg3[%c0_5, %c0_6] : memref<128x128xbf16, #tpu.memory_space<vmem>>, vector<128x128xbf16>
    %cst_7 = arith.constant dense<0.000000e+00> : vector<8x128xf32>
    %12 = tpu.matmul %4, %11, %cst_7 {dimension_numbers = #tpu.dot_dimension_numbers<[1], [0], [0], [1], [0, 0, 1, 1], [], []>} : vector<8x128xbf16>, vector<128x128xbf16>, vector<8x128xf32> -> vector<8x128xf32>
    %13 = arith.index_cast %5 : i32 to index
    %c0_8 = arith.constant 0 : index
    %14 = vector.load %arg8[%13, %c0_8] : memref<32x128xf32, #tpu.memory_space<vmem>>, vector<8x128xf32>
    tpu.vector_store %arg8[%13, %c0_8], %12 {strides = array<i32>} : memref<32x128xf32, #tpu.memory_space<vmem>>, vector<8x128xf32>,
    %c1 = arith.constant 1 : index
    %15 = arith.index_cast %1 : i32 to index
    %c0_9 = arith.constant 0 : index
    %16 = vector.load %arg1[%c1, %15, %c0_9] : memref<4x8x128xbf16, #tpu.memory_space<vmem>>, vector<1x8x128xbf16>
    %17 = vector.shape_cast %16 : vector<1x8x128xbf16> to vector<8x128xbf16>
    %c8_i32_10 = arith.constant 8 : i32
    %18 = arith.addi %c8_i32_10, %1 : i32
    %c0_11 = arith.constant 0 : index
    %c0_12 = arith.constant 0 : index
    %19 = vector.load %arg2[%c0_11, %c0_12] : memref<128x128xbf16, #tpu.memory_space<vmem>>, vector<128x128xbf16>
    %cst_13 = arith.constant dense<0.000000e+00> : vector<8x128xf32>
    %20 = tpu.matmul %17, %19, %cst_13 {dimension_numbers = #tpu.dot_dimension_numbers<[1], [0], [0], [1], [0, 0, 1, 1], [], []>} : vector<8x128xbf16>, vector<128x128xbf16>, vector<8x128xf32> -> vector<8x128xf32>
    %21 = arith.truncf %20 : vector<8x128xf32> to vector<8x128xbf16>
    %22 = arith.index_cast %18 : i32 to index
    %c0_14 = arith.constant 0 : index
    %23 = vector.load %arg7[%22, %c0_14] : memref<32x128xbf16, #tpu.memory_space<vmem>>, vector<8x128xbf16>
    tpu.vector_store %arg7[%22, %c0_14], %21 {strides = array<i32>} : memref<32x128xbf16, #tpu.memory_space<vmem>>, vector<8x128xbf16>,
    %c0_15 = arith.constant 0 : index
    %c0_16 = arith.constant 0 : index
    %24 = vector.load %arg3[%c0_15, %c0_16] : memref<128x128xbf16, #tpu.memory_space<vmem>>, vector<128x128xbf16>
    %cst_17 = arith.constant dense<0.000000e+00> : vector<8x128xf32>
    %25 = tpu.matmul %17, %24, %cst_17 {dimension_numbers = #tpu.dot_dimension_numbers<[1], [0], [0], [1], [0, 0, 1, 1], [], []>} : vector<8x128xbf16>, vector<128x128xbf16>, vector<8x128xf32> -> vector<8x128xf32>
    %26 = arith.index_cast %18 : i32 to index
    %c0_18 = arith.constant 0 : index
    %27 = vector.load %arg8[%26, %c0_18] : memref<32x128xf32, #tpu.memory_space<vmem>>, vector<8x128xf32>
    tpu.vector_store %arg8[%26, %c0_18], %25 {strides = array<i32>} : memref<32x128xf32, #tpu.memory_space<vmem>>, vector<8x128xf32>,
    %c2 = arith.constant 2 : index
    %28 = arith.index_cast %1 : i32 to index
    %c0_19 = arith.constant 0 : index
    %29 = vector.load %arg1[%c2, %28, %c0_19] : memref<4x8x128xbf16, #tpu.memory_space<vmem>>, vector<1x8x128xbf16>
    %30 = vector.shape_cast %29 : vector<1x8x128xbf16> to vector<8x128xbf16>
    %c16_i32 = arith.constant 16 : i32
    %31 = arith.addi %c16_i32, %1 : i32
    %c0_20 = arith.constant 0 : index
    %c0_21 = arith.constant 0 : index
    %32 = vector.load %arg2[%c0_20, %c0_21] : memref<128x128xbf16, #tpu.memory_space<vmem>>, vector<128x128xbf16>
    %cst_22 = arith.constant dense<0.000000e+00> : vector<8x128xf32>
    %33 = tpu.matmul %30, %32, %cst_22 {dimension_numbers = #tpu.dot_dimension_numbers<[1], [0], [0], [1], [0, 0, 1, 1], [], []>} : vector<8x128xbf16>, vector<128x128xbf16>, vector<8x128xf32> -> vector<8x128xf32>
    %34 = arith.truncf %33 : vector<8x128xf32> to vector<8x128xbf16>
    %35 = arith.index_cast %31 : i32 to index
    %c0_23 = arith.constant 0 : index
    %36 = vector.load %arg7[%35, %c0_23] : memref<32x128xbf16, #tpu.memory_space<vmem>>, vector<8x128xbf16>
    tpu.vector_store %arg7[%35, %c0_23], %34 {strides = array<i32>} : memref<32x128xbf16, #tpu.memory_space<vmem>>, vector<8x128xbf16>,
    %c0_24 = arith.constant 0 : index
    %c0_25 = arith.constant 0 : index
    %37 = vector.load %arg3[%c0_24, %c0_25] : memref<128x128xbf16, #tpu.memory_space<vmem>>, vector<128x128xbf16>
    %cst_26 = arith.constant dense<0.000000e+00> : vector<8x128xf32>
    %38 = tpu.matmul %30, %37, %cst_26 {dimension_numbers = #tpu.dot_dimension_numbers<[1], [0], [0], [1], [0, 0, 1, 1], [], []>} : vector<8x128xbf16>, vector<128x128xbf16>, vector<8x128xf32> -> vector<8x128xf32>
    %39 = arith.index_cast %31 : i32 to index
    %c0_27 = arith.constant 0 : index
    %40 = vector.load %arg8[%39, %c0_27] : memref<32x128xf32, #tpu.memory_space<vmem>>, vector<8x128xf32>
    tpu.vector_store %arg8[%39, %c0_27], %38 {strides = array<i32>} : memref<32x128xf32, #tpu.memory_space<vmem>>, vector<8x128xf32>,
    %c3 = arith.constant 3 : index
    %41 = arith.index_cast %1 : i32 to index
    %c0_28 = arith.constant 0 : index
    %42 = vector.load %arg1[%c3, %41, %c0_28] : memref<4x8x128xbf16, #tpu.memory_space<vmem>>, vector<1x8x128xbf16>
    %43 = vector.shape_cast %42 : vector<1x8x128xbf16> to vector<8x128xbf16>
    %c24_i32 = arith.constant 24 : i32
    %44 = arith.addi %c24_i32, %1 : i32
    %c0_29 = arith.constant 0 : index
    %c0_30 = arith.constant 0 : index
    %45 = vector.load %arg2[%c0_29, %c0_30] : memref<128x128xbf16, #tpu.memory_space<vmem>>, vector<128x128xbf16>
    %cst_31 = arith.constant dense<0.000000e+00> : vector<8x128xf32>
    %46 = tpu.matmul %43, %45, %cst_31 {dimension_numbers = #tpu.dot_dimension_numbers<[1], [0], [0], [1], [0, 0, 1, 1], [], []>} : vector<8x128xbf16>, vector<128x128xbf16>, vector<8x128xf32> -> vector<8x128xf32>
    %47 = arith.truncf %46 : vector<8x128xf32> to vector<8x128xbf16>
    %48 = arith.index_cast %44 : i32 to index
    %c0_32 = arith.constant 0 : index
    %49 = vector.load %arg7[%48, %c0_32] : memref<32x128xbf16, #tpu.memory_space<vmem>>, vector<8x128xbf16>
    tpu.vector_store %arg7[%48, %c0_32], %47 {strides = array<i32>} : memref<32x128xbf16, #tpu.memory_space<vmem>>, vector<8x128xbf16>,
    %c0_33 = arith.constant 0 : index
    %c0_34 = arith.constant 0 : index
    %50 = vector.load %arg3[%c0_33, %c0_34] : memref<128x128xbf16, #tpu.memory_space<vmem>>, vector<128x128xbf16>
    %cst_35 = arith.constant dense<0.000000e+00> : vector<8x128xf32>
    %51 = tpu.matmul %43, %50, %cst_35 {dimension_numbers = #tpu.dot_dimension_numbers<[1], [0], [0], [1], [0, 0, 1, 1], [], []>} : vector<8x128xbf16>, vector<128x128xbf16>, vector<8x128xf32> -> vector<8x128xf32>
    %52 = arith.index_cast %44 : i32 to index
    %c0_36 = arith.constant 0 : index
    %53 = vector.load %arg8[%52, %c0_36] : memref<32x128xf32, #tpu.memory_space<vmem>>, vector<8x128xf32>
    tpu.vector_store %arg8[%52, %c0_36], %51 {strides = array<i32>} : memref<32x128xf32, #tpu.memory_space<vmem>>, vector<8x128xf32>,
    %c1_i32 = arith.constant 1 : i32
    %c0_i32_37 = arith.constant 0 : i32
    %c8_i32_38 = arith.constant 8 : i32
    %54 = arith.muli %c0_i32_37, %c8_i32_38 : i32
    %55 = tpu.assume_multiple %54, 8 : i32
    %c0_i32_39 = arith.constant 0 : i32
    %56 = arith.addi %c0_i32_39, %55 : i32
    %57 = arith.index_cast %56 : i32 to index
    %c0_40 = arith.constant 0 : index
    %58 = vector.load %arg8[%57, %c0_40] : memref<32x128xf32, #tpu.memory_space<vmem>>, vector<8x16xf32>
    %c8_i32_41 = arith.constant 8 : i32
    %59 = arith.addi %c8_i32_41, %55 : i32
    %60 = arith.index_cast %59 : i32 to index
    %c0_42 = arith.constant 0 : index
    %61 = vector.load %arg8[%60, %c0_42] : memref<32x128xf32, #tpu.memory_space<vmem>>, vector<8x16xf32>
    %62 = arith.maximumf %58, %61 : vector<8x16xf32>
    %c16_i32_43 = arith.constant 16 : i32
    %63 = arith.addi %c16_i32_43, %55 : i32
    %64 = arith.index_cast %63 : i32 to index
    %c0_44 = arith.constant 0 : index
    %65 = vector.load %arg8[%64, %c0_44] : memref<32x128xf32, #tpu.memory_space<vmem>>, vector<8x16xf32>
    %66 = arith.maximumf %62, %65 : vector<8x16xf32>
    %c24_i32_45 = arith.constant 24 : i32
    %67 = arith.addi %c24_i32_45, %55 : i32
    %68 = arith.index_cast %67 : i32 to index
    %c0_46 = arith.constant 0 : index
    %69 = vector.load %arg8[%68, %c0_46] : memref<32x128xf32, #tpu.memory_space<vmem>>, vector<8x16xf32>
    %70 = arith.maximumf %66, %69 : vector<8x16xf32>
    %cst_47 = arith.constant 0.000000e+00 : f32
    %71 = vector.broadcast %cst_47 : f32 to vector<8x16xf32>
    %c0_i32_48 = arith.constant 0 : i32
    %72 = arith.addi %c0_i32_48, %55 : i32
    %73 = arith.index_cast %72 : i32 to index
    %c0_49 = arith.constant 0 : index
    %74 = vector.load %arg8[%73, %c0_49] : memref<32x128xf32, #tpu.memory_space<vmem>>, vector<8x16xf32>
    %75 = arith.subf %74, %70 : vector<8x16xf32>
    %76 = math.exp %75 : vector<8x16xf32>
    %77 = arith.addf %71, %76 : vector<8x16xf32>
    %c8_i32_50 = arith.constant 8 : i32
    %78 = arith.addi %c8_i32_50, %55 : i32
    %79 = arith.index_cast %78 : i32 to index
    %c0_51 = arith.constant 0 : index
    %80 = vector.load %arg8[%79, %c0_51] : memref<32x128xf32, #tpu.memory_space<vmem>>, vector<8x16xf32>
    %81 = arith.subf %80, %70 : vector<8x16xf32>
    %82 = math.exp %81 : vector<8x16xf32>
    %83 = arith.addf %77, %82 : vector<8x16xf32>
    %c16_i32_52 = arith.constant 16 : i32
    %84 = arith.addi %c16_i32_52, %55 : i32
    %85 = arith.index_cast %84 : i32 to index
    %c0_53 = arith.constant 0 : index
    %86 = vector.load %arg8[%85, %c0_53] : memref<32x128xf32, #tpu.memory_space<vmem>>, vector<8x16xf32>
    %87 = arith.subf %86, %70 : vector<8x16xf32>
    %88 = math.exp %87 : vector<8x16xf32>
    %89 = arith.addf %83, %88 : vector<8x16xf32>
    %c24_i32_54 = arith.constant 24 : i32
    %90 = arith.addi %c24_i32_54, %55 : i32
    %91 = arith.index_cast %90 : i32 to index
    %c0_55 = arith.constant 0 : index
    %92 = vector.load %arg8[%91, %c0_55] : memref<32x128xf32, #tpu.memory_space<vmem>>, vector<8x16xf32>
    %93 = arith.subf %92, %70 : vector<8x16xf32>
    %94 = math.exp %93 : vector<8x16xf32>
    %95 = arith.addf %89, %94 : vector<8x16xf32>
    %96 = tpu.reciprocal %95 {approx = true} : vector<8x16xf32> -> vector<8x16xf32>
    %cst_56 = arith.constant 0.000000e+00 : f32
    %97 = vector.broadcast %cst_56 : f32 to vector<8x128xf32>
    %c0_i32_57 = arith.constant 0 : i32
    %98 = arith.addi %c0_i32_57, %55 : i32
    %99 = arith.index_cast %98 : i32 to index
    %c0_58 = arith.constant 0 : index
    %100 = vector.load %arg8[%99, %c0_58] : memref<32x128xf32, #tpu.memory_space<vmem>>, vector<8x16xf32>
    %101 = arith.subf %100, %70 : vector<8x16xf32>
    %102 = math.exp %101 : vector<8x16xf32>
    %103 = arith.mulf %102, %96 : vector<8x16xf32>
    %c0_i32_59 = arith.constant 0 : i32
    %104 = arith.addi %c0_i32_59, %55 : i32
    %105 = arith.index_cast %104 : i32 to index
    %c0_60 = arith.constant 0 : index
    %106 = vector.load %arg7[%105, %c0_60] : memref<32x128xbf16, #tpu.memory_space<vmem>>, vector<8x128xbf16>
    %107 = tpu.concatenate %103, %103, %103, %103, %103, %103, %103, %103 in 1 : vector<8x16xf32>, vector<8x16xf32>, vector<8x16xf32>, vector<8x16xf32>, vector<8x16xf32>, vector<8x16xf32>, vector<8x16xf32>, vector<8x16xf32> -> vector<8x128xf32>
    %108 = arith.extf %106 : vector<8x128xbf16> to vector<8x128xf32>
    %109 = arith.mulf %107, %108 : vector<8x128xf32>
    %110 = arith.addf %97, %109 : vector<8x128xf32>
    %c8_i32_61 = arith.constant 8 : i32
    %111 = arith.addi %c8_i32_61, %55 : i32
    %112 = arith.index_cast %111 : i32 to index
    %c0_62 = arith.constant 0 : index
    %113 = vector.load %arg8[%112, %c0_62] : memref<32x128xf32, #tpu.memory_space<vmem>>, vector<8x16xf32>
    %114 = arith.subf %113, %70 : vector<8x16xf32>
    %115 = math.exp %114 : vector<8x16xf32>
    %116 = arith.mulf %115, %96 : vector<8x16xf32>
    %c8_i32_63 = arith.constant 8 : i32
    %117 = arith.addi %c8_i32_63, %55 : i32
    %118 = arith.index_cast %117 : i32 to index
    %c0_64 = arith.constant 0 : index
    %119 = vector.load %arg7[%118, %c0_64] : memref<32x128xbf16, #tpu.memory_space<vmem>>, vector<8x128xbf16>
    %120 = tpu.concatenate %116, %116, %116, %116, %116, %116, %116, %116 in 1 : vector<8x16xf32>, vector<8x16xf32>, vector<8x16xf32>, vector<8x16xf32>, vector<8x16xf32>, vector<8x16xf32>, vector<8x16xf32>, vector<8x16xf32> -> vector<8x128xf32>
    %121 = arith.extf %119 : vector<8x128xbf16> to vector<8x128xf32>
    %122 = arith.mulf %120, %121 : vector<8x128xf32>
    %123 = arith.addf %110, %122 : vector<8x128xf32>
    %c16_i32_65 = arith.constant 16 : i32
    %124 = arith.addi %c16_i32_65, %55 : i32
    %125 = arith.index_cast %124 : i32 to index
    %c0_66 = arith.constant 0 : index
    %126 = vector.load %arg8[%125, %c0_66] : memref<32x128xf32, #tpu.memory_space<vmem>>, vector<8x16xf32>
    %127 = arith.subf %126, %70 : vector<8x16xf32>
    %128 = math.exp %127 : vector<8x16xf32>
    %129 = arith.mulf %128, %96 : vector<8x16xf32>
    %c16_i32_67 = arith.constant 16 : i32
    %130 = arith.addi %c16_i32_67, %55 : i32
    %131 = arith.index_cast %130 : i32 to index
    %c0_68 = arith.constant 0 : index
    %132 = vector.load %arg7[%131, %c0_68] : memref<32x128xbf16, #tpu.memory_space<vmem>>, vector<8x128xbf16>
    %133 = tpu.concatenate %129, %129, %129, %129, %129, %129, %129, %129 in 1 : vector<8x16xf32>, vector<8x16xf32>, vector<8x16xf32>, vector<8x16xf32>, vector<8x16xf32>, vector<8x16xf32>, vector<8x16xf32>, vector<8x16xf32> -> vector<8x128xf32>
    %134 = arith.extf %132 : vector<8x128xbf16> to vector<8x128xf32>
    %135 = arith.mulf %133, %134 : vector<8x128xf32>
    %136 = arith.addf %123, %135 : vector<8x128xf32>
    %c24_i32_69 = arith.constant 24 : i32
    %137 = arith.addi %c24_i32_69, %55 : i32
    %138 = arith.index_cast %137 : i32 to index
    %c0_70 = arith.constant 0 : index
    %139 = vector.load %arg8[%138, %c0_70] : memref<32x128xf32, #tpu.memory_space<vmem>>, vector<8x16xf32>
    %140 = arith.subf %139, %70 : vector<8x16xf32>
    %141 = math.exp %140 : vector<8x16xf32>
    %142 = arith.mulf %141, %96 : vector<8x16xf32>
    %c24_i32_71 = arith.constant 24 : i32
    %143 = arith.addi %c24_i32_71, %55 : i32
    %144 = arith.index_cast %143 : i32 to index
    %c0_72 = arith.constant 0 : index
    %145 = vector.load %arg7[%144, %c0_72] : memref<32x128xbf16, #tpu.memory_space<vmem>>, vector<8x128xbf16>
    %146 = tpu.concatenate %142, %142, %142, %142, %142, %142, %142, %142 in 1 : vector<8x16xf32>, vector<8x16xf32>, vector<8x16xf32>, vector<8x16xf32>, vector<8x16xf32>, vector<8x16xf32>, vector<8x16xf32>, vector<8x16xf32> -> vector<8x128xf32>
    %147 = arith.extf %145 : vector<8x128xbf16> to vector<8x128xf32>
    %148 = arith.mulf %146, %147 : vector<8x128xf32>
    %149 = arith.addf %136, %148 : vector<8x128xf32>
    %150 = arith.truncf %149 : vector<8x128xf32> to vector<8x128xbf16>
    %c0_73 = arith.constant 0 : index
    %c0_74 = arith.constant 0 : index
    %151 = vector.load %arg4[%c0_73, %c0_74] : memref<128x128xbf16, #tpu.memory_space<vmem>>, vector<128x128xbf16>
    %cst_75 = arith.constant dense<0.000000e+00> : vector<8x128xf32>
    %152 = tpu.matmul %150, %151, %cst_75 {dimension_numbers = #tpu.dot_dimension_numbers<[1], [0], [0], [1], [0, 0, 1, 1], [], []>} : vector<8x128xbf16>, vector<128x128xbf16>, vector<8x128xf32> -> vector<8x128xf32>
    %c0_76 = arith.constant 0 : index
    %c0_77 = arith.constant 0 : index
    %153 = vector.load %arg5[%c0_76, %c0_77] : memref<1x128xf32, #tpu.memory_space<vmem>>, vector<1x128xf32>
    %154 = vector.broadcast %153 : vector<1x128xf32> to vector<8x128xf32>
    %155 = arith.addf %152, %154 : vector<8x128xf32>
    %156 = arith.index_cast %55 : i32 to index
    %c0_78 = arith.constant 0 : index
    %157 = vector.load %arg6[%156, %c0_78] : memref<8x128xf32, #tpu.memory_space<vmem>>, vector<8x128xf32>
    tpu.vector_store %arg6[%156, %c0_78], %155 {strides = array<i32>} : memref<8x128xf32, #tpu.memory_space<vmem>>, vector<8x128xf32>,
    %c1_i32_79 = arith.constant 1 : i32
    return
  }
  func.func @transform_0(%arg0: i32) -> (i32, i32, i32) {
    %c0_i32 = arith.constant 0 : i32
    %c0_i32_0 = arith.constant 0 : i32
    %c0_i32_1 = arith.constant 0 : i32
    return %c0_i32, %arg0, %c0_i32_0 : i32, i32, i32
  }
  func.func @transform_1(%arg0: i32) -> (i32, i32) {
    %c0_i32 = arith.constant 0 : i32
    %c0_i32_0 = arith.constant 0 : i32
    %c0_i32_1 = arith.constant 0 : i32
    return %c0_i32, %c0_i32_0 : i32, i32
  }
  func.func @transform_2(%arg0: i32) -> (i32, i32) {
    %c0_i32 = arith.constant 0 : i32
    %c0_i32_0 = arith.constant 0 : i32
    %c0_i32_1 = arith.constant 0 : i32
    return %c0_i32, %c0_i32_0 : i32, i32
  }
  func.func @transform_3(%arg0: i32) -> (i32, i32) {
    %c0_i32 = arith.constant 0 : i32
    %c0_i32_0 = arith.constant 0 : i32
    %c0_i32_1 = arith.constant 0 : i32
    return %c0_i32, %c0_i32_0 : i32, i32
  }
  func.func @transform_4(%arg0: i32) -> (i32, i32) {
    %c0_i32 = arith.constant 0 : i32
    %c0_i32_0 = arith.constant 0 : i32
    %c0_i32_1 = arith.constant 0 : i32
    return %c0_i32, %c0_i32_0 : i32, i32
  }
  func.func @transform_5(%arg0: i32) -> (i32, i32) {
    %c0_i32 = arith.constant 0 : i32
    %c0_i32_0 = arith.constant 0 : i32
    return %arg0, %c0_i32 : i32, i32
  }
}

</mosaic_0001>

<llo_original>
// kernel: attn_downsample.1
$region0: #{attn_downsample.1}
  #allocation0 [shape = 'u32[]', space=smem, size = 0x4, offset = 0x4, fixed_abs, tag = 'smem constant byte address 0x4 - core index']
  #allocation1 [shape = 'u32[144,128]{1,0:T(1,128)}', space=vmem, size = 0x12000, scoped, tag = 'internal scratch']
  #allocation2 [shape = 'bf16[32,128]{1,0:T(8,128)(2,1)}', space=vmem, size = 0x2000, scoped, tag = 'scratch operand']
  #allocation3 [shape = 'f32[32,128]{1,0:T(8,128)}', space=vmem, size = 0x4000, scoped, tag = 'scratch operand']
  #allocation4 [shape = 'bf16[8,128]{1,0:T(8,128)(2,1)}', space=vmem, size = 0x800, scoped, tag = 'scratch operand']
  %s0 = inlined_call_operand.vmem [shape: bf16[4,32,128], index: 0, kind: input, shape index: {}]
  %s1 = inlined_call_operand.vmem [shape: bf16[128,128], index: 1, kind: input, shape index: {}]
  %s2 = inlined_call_operand.vmem [shape: bf16[128,128], index: 2, kind: input, shape index: {}]
  %s3 = inlined_call_operand.vmem [shape: bf16[128,128], index: 3, kind: input, shape index: {}]
  %s4 = inlined_call_operand.vmem [shape: f32[1,128], index: 4, kind: input, shape index: {}]
  %s5 = inlined_call_operand.vmem [shape: f32[32,128], index: 5, kind: output, shape index: {}]
  %s6 = sld [smem:[#allocation0]]
  $region94: #{attn_downsample.1} parent=0
    _
  %s8 = ssub.s32 1, %s6
  %s9 = scalar_select 0, %s8, %s6
  $region1: #{attn_downsample.1} parent=0
    #allocation5 [shape = 'u8[16384]{0}', space=vmem, size = 0x4000, scoped, tag = 'input window, operand 0']
    loop: start=0, step=1, limit=6
    $region2: #{attn_downsample.1} parent=1 // loop_pre_header
      _
    $region3: #{attn_downsample.1} parent=1 // loop_header
      %s11 = sphi 0, %s15
      %p12 = scmp.ge.s32.totalorder %s11, 6
      %s21 = sphi 0, %s23
      %s24 = sphi 0, %s21
      %s25 = sphi 0, %s24
      %s41 = sphi 0, %s25
      %s45 = sphi 0, %s45
      %s47 = sphi 0, %s45
      %s48 = sphi 0, %s47
      %s62 = sphi 0, %s48
      %s66 = sphi 0, %s66
      %s68 = sphi 0, %s66
      %s69 = sphi 0, %s68
      %s83 = sphi 0, %s69
      %s87 = sphi 0, %s87
      %s89 = sphi 0, %s87
      %s90 = sphi 0, %s89
      %s104 = sphi 0, %s90
      %s108 = sphi 0, %s108
      %s110 = sphi 0, %s108
      %s111 = sphi 0, %s110
      %s125 = sphi 0, %s111
      %s131 = sphi 0, %s133
      %s134 = sphi 0, %s131
      %s135 = sphi 0, %s134
      %s151 = sphi 0, %s135
    $region4: #{attn_downsample.1} parent=1 // loop_header_branch
      %14 = sbr.rel (%p12) target = $region8
    $region5: #{attn_downsample.1} parent=1 // loop_body
      %s16 = ssub.s32 %s11, 1
      %s17 = ssub.s32 %s11, 2
      %s18 = sadd.s32 %s11, 1
      %s19 = ssub.s32 %s11, %s18
      %p20 = scmp.eq.s32.totalorder %s19, 0
      %s22 = sadd.s32 %s21, 1
      %s23 = scalar_select %p20, %s21, %s22
      %p26 = pneg %p20
      %p27 = scmp.eq.s32.totalorder %s11, 3
      %p28 = por %p26, %p27
      %p29 = scmp.ne.s32.totalorder %s21, %s24
      %p30 = scmp.eq.s32.totalorder %s11, 0
      %p31 = por %p29, %p30
      %p32 = scmp.ne.s32.totalorder %s21, %s24
      %p33 = scmp.eq.s32.totalorder %s16, 3
      %p34 = por %p32, %p33
      %p35 = scmp.ne.s32.totalorder %s24, %s25
      %p36 = scmp.eq.s32.totalorder %s16, 0
      %p37 = por %p35, %p36
      %p38 = scmp.ne.s32.totalorder %s24, %s25
      %p39 = scmp.eq.s32.totalorder %s17, 3
      %p40 = por %p38, %p39
      %p42 = scmp.ne.s32.totalorder %s25, %s41
      %p43 = scmp.eq.s32.totalorder %s17, 0
      %p44 = por %p42, %p43
      %s46 = sadd.s32 %s45, 1
      %p49 = scmp.eq.s32.totalorder %s11, 3
      %p50 = scmp.ne.s32.totalorder %s45, %s47
      %p51 = scmp.eq.s32.totalorder %s11, 0
      %p52 = por %p50, %p51
      %p53 = scmp.ne.s32.totalorder %s45, %s47
      %p54 = scmp.eq.s32.totalorder %s16, 3
      %p55 = por %p53, %p54
      %p56 = scmp.ne.s32.totalorder %s47, %s48
      %p57 = scmp.eq.s32.totalorder %s16, 0
      %p58 = por %p56, %p57
      %p59 = scmp.ne.s32.totalorder %s47, %s48
      %p60 = scmp.eq.s32.totalorder %s17, 3
      %p61 = por %p59, %p60
      %p63 = scmp.ne.s32.totalorder %s48, %s62
      %p64 = scmp.eq.s32.totalorder %s17, 0
      %p65 = por %p63, %p64
      %s67 = sadd.s32 %s66, 1
      %p70 = scmp.eq.s32.totalorder %s11, 3
      %p71 = scmp.ne.s32.totalorder %s66, %s68
      %p72 = scmp.eq.s32.totalorder %s11, 0
      %p73 = por %p71, %p72
      %p74 = scmp.ne.s32.totalorder %s66, %s68
      %p75 = scmp.eq.s32.totalorder %s16, 3
      %p76 = por %p74, %p75
      %p77 = scmp.ne.s32.totalorder %s68, %s69
      %p78 = scmp.eq.s32.totalorder %s16, 0
      %p79 = por %p77, %p78
      %p80 = scmp.ne.s32.totalorder %s68, %s69
      %p81 = scmp.eq.s32.totalorder %s17, 3
      %p82 = por %p80, %p81
      %p84 = scmp.ne.s32.totalorder %s69, %s83
      %p85 = scmp.eq.s32.totalorder %s17, 0
      %p86 = por %p84, %p85
      %s88 = sadd.s32 %s87, 1
      %p91 = scmp.eq.s32.totalorder %s11, 3
      %p92 = scmp.ne.s32.totalorder %s87, %s89
      %p93 = scmp.eq.s32.totalorder %s11, 0
      %p94 = por %p92, %p93
      %p95 = scmp.ne.s32.totalorder %s87, %s89
      %p96 = scmp.eq.s32.totalorder %s16, 3
      %p97 = por %p95, %p96
      %p98 = scmp.ne.s32.totalorder %s89, %s90
      %p99 = scmp.eq.s32.totalorder %s16, 0
      %p100 = por %p98, %p99
      %p101 = scmp.ne.s32.totalorder %s89, %s90
      %p102 = scmp.eq.s32.totalorder %s17, 3
      %p103 = por %p101, %p102
      %p105 = scmp.ne.s32.totalorder %s90, %s104
      %p106 = scmp.eq.s32.totalorder %s17, 0
      %p107 = por %p105, %p106
      %s109 = sadd.s32 %s108, 1
      %p112 = scmp.eq.s32.totalorder %s11, 3
      %p113 = scmp.ne.s32.totalorder %s108, %s110
      %p114 = scmp.eq.s32.totalorder %s11, 0
      %p115 = por %p113, %p114
      %p116 = scmp.ne.s32.totalorder %s108, %s110
      %p117 = scmp.eq.s32.totalorder %s16, 3
      %p118 = por %p116, %p117
      %p119 = scmp.ne.s32.totalorder %s110, %s111
      %p120 = scmp.eq.s32.totalorder %s16, 0
      %p121 = por %p119, %p120
      %p122 = scmp.ne.s32.totalorder %s110, %s111
      %p123 = scmp.eq.s32.totalorder %s17, 3
      %p124 = por %p122, %p123
      %p126 = scmp.ne.s32.totalorder %s111, %s125
      %p127 = scmp.eq.s32.totalorder %s17, 0
      %p128 = por %p126, %p127
      %s129 = ssub.s32 %s11, %s18
      %p130 = scmp.eq.s32.totalorder %s129, 0
      %s132 = sadd.s32 %s131, 1
      %s133 = scalar_select %p130, %s131, %s132
      %p136 = pneg %p130
      %p137 = scmp.eq.s32.totalorder %s11, 3
      %p138 = por %p136, %p137
      %p139 = scmp.ne.s32.totalorder %s131, %s134
      %p140 = scmp.eq.s32.totalorder %s11, 0
      %p141 = por %p139, %p140
      %p142 = scmp.ne.s32.totalorder %s131, %s134
      %p143 = scmp.eq.s32.totalorder %s16, 3
      %p144 = por %p142, %p143
      %p145 = scmp.ne.s32.totalorder %s134, %s135
      %p146 = scmp.eq.s32.totalorder %s16, 0
      %p147 = por %p145, %p146
      %p148 = scmp.ne.s32.totalorder %s134, %s135
      %p149 = scmp.eq.s32.totalorder %s17, 3
      %p150 = por %p148, %p149
      %p152 = scmp.ne.s32.totalorder %s135, %s151
      %p153 = scmp.eq.s32.totalorder %s17, 0
      %p154 = por %p152, %p153
      %p155 = scmp.le.s32.totalorder 1, %s11
      %p156 = scmp.lt.s32.totalorder %s11, 5
      %p157 = pnand %p155, %p156
      %p158 = pneg %p157
      // Predicated region
      $region9: #{attn_downsample.1} parent=5 // pred_check
        _
      $region10: #{attn_downsample.1} parent=5 // pred_check_branch
        %160 = sbr.rel (%p157) target = $region12
      $region11: #{attn_downsample.1} parent=5 // pred_region
        %s161 = ssub.s32 %s11, 1
        // Predicated region
        $region13: #{attn_downsample.1} parent=11 // pred_check
          %p162 = pneg %p58
        $region14: #{attn_downsample.1} parent=11 // pred_check_branch
          %164 = sbr.rel (%p162) target = $region16
        $region15: #{attn_downsample.1} parent=11 // pred_region
          _
        $region16: #{attn_downsample.1} parent=11 // pred_fallthru
          _
        // Predicated region
        $region17: #{attn_downsample.1} parent=11 // pred_check
          %p165 = pneg %p79
        $region18: #{attn_downsample.1} parent=11 // pred_check_branch
          %167 = sbr.rel (%p165) target = $region20
        $region19: #{attn_downsample.1} parent=11 // pred_region
          _
        $region20: #{attn_downsample.1} parent=11 // pred_fallthru
          _
        // Predicated region
        $region21: #{attn_downsample.1} parent=11 // pred_check
          %p168 = pneg %p100
        $region22: #{attn_downsample.1} parent=11 // pred_check_branch
          %170 = sbr.rel (%p168) target = $region24
        $region23: #{attn_downsample.1} parent=11 // pred_region
          _
        $region24: #{attn_downsample.1} parent=11 // pred_fallthru
          _
        // Predicated region
        $region25: #{attn_downsample.1} parent=11 // pred_check
          %p171 = pneg %p121
        $region26: #{attn_downsample.1} parent=11 // pred_check_branch
          %173 = sbr.rel (%p171) target = $region28
        $region27: #{attn_downsample.1} parent=11 // pred_region
          _
        $region28: #{attn_downsample.1} parent=11 // pred_fallthru
          _
      $region12: #{attn_downsample.1} parent=5 // pred_fallthru
        _
      %p174 = scmp.lt.s32.totalorder %s11, 4
      // Predicated region
      $region29: #{attn_downsample.1} parent=5 // pred_check
        %p175 = pneg %p174
      $region30: #{attn_downsample.1} parent=5 // pred_check_branch
        %177 = sbr.rel (%p175) target = $region32
      $region31: #{attn_downsample.1} parent=5 // pred_region
        // Predicated region
        $region33: #{attn_downsample.1} parent=31 // pred_check
          %p178 = pneg %p31
        $region34: #{attn_downsample.1} parent=31 // pred_check_branch
          %180 = sbr.rel (%p178) target = $region36
        $region35: #{attn_downsample.1} parent=31 // pred_region
          %s181 = sand.u32 %s21, 1
          %s182 = sand.u32 %s21, 1
          %s183 = smul.addr %s182, 16
          %s184 = scalar_lea.vmem [#allocation5], %s183
          %s185 = smul.addr %s11, 4
          %s186 = scalar_lea.vmem %s0, %s185
          // Predicated region
          $region37: #{attn_downsample.1} parent=35 // pred_check
            _
          $region38: #{attn_downsample.1} parent=35 // pred_check_branch
            %188 = sbr.rel (0) target = $region40
          $region39: #{attn_downsample.1} parent=35 // pred_region
            // Predicated region
            $region41: #{attn_downsample.1} parent=39 // pred_check
              _
            $region42: #{attn_downsample.1} parent=39 // pred_check_branch
              %190 = sbr.rel target = $region44
            $region43: #{attn_downsample.1} parent=39 // pred_region
              // Predicated region
              $region56: #{attn_downsample.1} parent=43 // pred_check
                _
              $region57: #{attn_downsample.1} parent=43 // pred_check_branch
                %212 = sbr.rel (0) target = $region59
              $region58: #{attn_downsample.1} parent=43 // pred_region
                loop: start=0, step=1, limit=1
                $region60: #{attn_downsample.1} parent=58 // loop_pre_header
                  _
                $region61: #{attn_downsample.1} parent=58 // loop_header
                  %s214 = sphi 0, %s218
                  %p215 = scmp.ge.s32.totalorder %s214, 1
                  %s219 = sphi %s186, %s186
                  %s220 = sphi %s184, %s184
                $region62: #{attn_downsample.1} parent=58 // loop_header_branch
                  %217 = sbr.rel (%p215) target = $region66
                $region63: #{attn_downsample.1} parent=58 // loop_body
                  _
                $region64: #{attn_downsample.1} parent=58 // loop_footer
                  %s218 = sadd.s32 1, %s214
                $region65: #{attn_downsample.1} parent=58 // loop_footer_branch
                  %213 = sbr.rel target = $region61
                $region66: #{attn_downsample.1} parent=58 // loop_exit
                  _
                %s222 = ssub.s32 16, 1
                loop: start=0, step=1, limit=1
                $region67: #{attn_downsample.1} parent=58 // loop_pre_header
                  _
                $region68: #{attn_downsample.1} parent=58 // loop_header
                  %s224 = sphi 0, %s228
                  %p225 = scmp.ge.s32.totalorder %s224, 1
                  %s229 = sphi %s186, %s186
                  %s230 = sphi %s184, %s184
                $region69: #{attn_downsample.1} parent=58 // loop_header_branch
                  %227 = sbr.rel (%p225) target = $region73
                $region70: #{attn_downsample.1} parent=58 // loop_body
                  %v231 = vld [vmem:[%s229] sm:%s222]
                  %232 = vst [vmem:[%s230] sm:%s222] %v231
                  %v233 = vld [vmem:[%s229 + $0x10] sm:%s222]
                  %234 = vst [vmem:[%s230 + $0x4] sm:%s222] %v233
                  %v235 = vld [vmem:[%s229 + $0x20] sm:%s222]
                  %236 = vst [vmem:[%s230 + $0x8] sm:%s222] %v235
                  %v237 = vld [vmem:[%s229 + $0x30] sm:%s222]
                  %238 = vst [vmem:[%s230 + $0xc] sm:%s222] %v237
                $region71: #{attn_downsample.1} parent=58 // loop_footer
                  %s228 = sadd.s32 1, %s224
                $region72: #{attn_downsample.1} parent=58 // loop_footer_branch
                  %223 = sbr.rel target = $region68
                $region73: #{attn_downsample.1} parent=58 // loop_exit
                  _
              $region59: #{attn_downsample.1} parent=43 // pred_fallthru
                _
            $region44: #{attn_downsample.1} parent=39 // pred_fallthru
              _
            // Predicated region
            $region45: #{attn_downsample.1} parent=39 // pred_check
              _
            $region46: #{attn_downsample.1} parent=39 // pred_check_branch
              %192 = sbr.rel (0) target = $region48
            $region47: #{attn_downsample.1} parent=39 // pred_region
              %s194 = ssub.s32 16, 1
              loop: start=0, step=1, limit=1
              $region49: #{attn_downsample.1} parent=47 // loop_pre_header
                _
              $region50: #{attn_downsample.1} parent=47 // loop_header
                %s196 = sphi 0, %s200
                %p197 = scmp.ge.s32.totalorder %s196, 1
                %s201 = sphi %s186, %s186
                %s202 = sphi %s184, %s184
              $region51: #{attn_downsample.1} parent=47 // loop_header_branch
                %199 = sbr.rel (%p197) target = $region55
              $region52: #{attn_downsample.1} parent=47 // loop_body
                %v203 = vld [vmem:[%s201] sm:%s194]
                %204 = vst [vmem:[%s202] sm:%s194] %v203
                %v205 = vld [vmem:[%s201 + $0x10] sm:%s194]
                %206 = vst [vmem:[%s202 + $0x4] sm:%s194] %v205
                %v207 = vld [vmem:[%s201 + $0x20] sm:%s194]
                %208 = vst [vmem:[%s202 + $0x8] sm:%s194] %v207
                %v209 = vld [vmem:[%s201 + $0x30] sm:%s194]
                %210 = vst [vmem:[%s202 + $0xc] sm:%s194] %v209
              $region53: #{attn_downsample.1} parent=47 // loop_footer
                %s200 = sadd.s32 1, %s196
              $region54: #{attn_downsample.1} parent=47 // loop_footer_branch
                %195 = sbr.rel target = $region50
              $region55: #{attn_downsample.1} parent=47 // loop_exit
                _
            $region48: #{attn_downsample.1} parent=39 // pred_fallthru
              _
          $region40: #{attn_downsample.1} parent=35 // pred_fallthru
            _
          %239 = vnop
        $region36: #{attn_downsample.1} parent=31 // pred_fallthru
          _
      $region32: #{attn_downsample.1} parent=5 // pred_fallthru
        _
      %p240 = scmp.le.s32.totalorder 1, %s11
      %p241 = scmp.lt.s32.totalorder %s11, 5
      %p242 = pnand %p240, %p241
      %p243 = pneg %p242
      // Predicated region
      $region74: #{attn_downsample.1} parent=5 // pred_check
        _
      $region75: #{attn_downsample.1} parent=5 // pred_check_branch
        %245 = sbr.rel (%p242) target = $region77
      $region76: #{attn_downsample.1} parent=5 // pred_region
        %s246 = ssub.s32 %s11, 1
        %s247 = sand.u32 %s24, 1
        %s248 = sand.u32 %s24, 1
        %s249 = smul.addr %s248, 16
        %s250 = scalar_lea.vmem [#allocation5], %s249
        // Predicated region
        $region78: #{attn_downsample.1} parent=76 // pred_check
          %p251 = pneg %p37
        $region79: #{attn_downsample.1} parent=76 // pred_check_branch
          %253 = sbr.rel (%p251) target = $region81
        $region80: #{attn_downsample.1} parent=76 // pred_region
          _
        $region81: #{attn_downsample.1} parent=76 // pred_fallthru
          _
        %s254 = sand.u32 %s24, 1
        %s255 = sand.u32 %s24, 1
        %s256 = smul.addr %s255, 16
        %s257 = scalar_lea.vmem [#allocation5], %s256
        %p258 = pneg %p37
        %p259 = pneg %p34
        %p260 = pneg %p58
        %p261 = pneg %p55
        %p262 = pneg %p79
        %p263 = pneg %p76
        %p264 = pneg %p100
        %p265 = pneg %p97
        %p266 = pneg %p121
        %p267 = pneg %p118
        %p268 = pneg %p147
        %p269 = pneg %p144
        %p270 = scmp.lt.s32.totalorder %s16, 3
        %s271 = scalar_select %p270, %s16, 3
        %s272 = smul.addr %s271, 8
        %s273 = scalar_lea.vmem %s5, %s272
        %p274 = scmp.lt.s32.totalorder %s16, 3
        %s275 = scalar_select %p274, %s16, 3
        %s276 = smul.addr %s275, 8
        %s277 = scalar_lea.vmem %s5, %s276
        %v279 = vld [vmem:[%s250] sm:$0xf]
        %v280 = vld [vmem:[%s1] sm:$0xf]
        %v281 = vld [vmem:[%s1 + $0x4] sm:$0xf]
        %v282 = vld [vmem:[%s1 + $0x8] sm:$0xf]
        %v283 = vld [vmem:[%s1 + $0xc] sm:$0xf]
        %v284 = vld [vmem:[%s1 + $0x10] sm:$0xf]
        %v285 = vld [vmem:[%s1 + $0x14] sm:$0xf]
        %v286 = vld [vmem:[%s1 + $0x18] sm:$0xf]
        %v287 = vld [vmem:[%s1 + $0x1c] sm:$0xf]
        %v288 = vld [vmem:[%s1 + $0x20] sm:$0xf]
        %v289 = vld [vmem:[%s1 + $0x24] sm:$0xf]
        %v290 = vld [vmem:[%s1 + $0x28] sm:$0xf]
        %v291 = vld [vmem:[%s1 + $0x2c] sm:$0xf]
        %v292 = vld [vmem:[%s1 + $0x30] sm:$0xf]
        %v293 = vld [vmem:[%s1 + $0x34] sm:$0xf]
        %v294 = vld [vmem:[%s1 + $0x38] sm:$0xf]
        %v295 = vld [vmem:[%s1 + $0x3c] sm:$0xf]
        %v312 = vunpack.c.l.b16 %v280
        %v313 = vunpack.c.l.b16 %v281
        %v314 = vunpack.c.l.b16 %v282
        %v315 = vunpack.c.l.b16 %v283
        %v316 = vunpack.c.l.b16 %v284
        %v317 = vunpack.c.l.b16 %v285
        %v318 = vunpack.c.l.b16 %v286
        %v319 = vunpack.c.l.b16 %v287
        %v320 = vunpack.c.l.b16 %v288
        %v321 = vunpack.c.l.b16 %v289
        %v322 = vunpack.c.l.b16 %v290
        %v323 = vunpack.c.l.b16 %v291
        %v324 = vunpack.c.l.b16 %v292
        %v325 = vunpack.c.l.b16 %v293
        %v326 = vunpack.c.l.b16 %v294
        %v327 = vunpack.c.l.b16 %v295
        %v328 = vpack.c.b16 %v313, %v312
        %v329 = vpack.c.b16 %v315, %v314
        %v330 = vpack.c.b16 %v317, %v316
        %v331 = vpack.c.b16 %v319, %v318
        %v332 = vpack.c.b16 %v321, %v320
        %v333 = vpack.c.b16 %v323, %v322
        %v334 = vpack.c.b16 %v325, %v324
        %v335 = vpack.c.b16 %v327, %v326
        %344 = vmatprep.subr.bf16.mxu0 0
        %345 = vmatpush1.bf16.msra.mxu0 %v335
        %346 = vmatprep.subr.bf16.mxu0 0
        %347 = vmatpush1.bf16.msra.mxu0 %v334
        %348 = vmatprep.subr.bf16.mxu0 0
        %349 = vmatpush1.bf16.msra.mxu0 %v333
        %350 = vmatprep.subr.bf16.mxu0 0
        %351 = vmatpush1.bf16.msra.mxu0 %v332
        %352 = vmatprep.subr.bf16.mxu0 0
        %353 = vmatpush1.bf16.msra.mxu0 %v331
        %354 = vmatprep.subr.bf16.mxu0 0
        %355 = vmatpush1.bf16.msra.mxu0 %v330
        %356 = vmatprep.subr.bf16.mxu0 0
        %357 = vmatpush1.bf16.msra.mxu0 %v329
        %358 = vmatprep.subr.bf16.mxu0 0
        %359 = vmatpush1.bf16.msra.mxu0 %v328
        %360 = vmatprep.subr.bf16.mxu0 0
        %361 = vmatpush2.bf16.msra.mxu0 0
        %362 = vmatprep.subr.bf16.mxu0 0
        %363 = vmatpush2.bf16.msra.mxu0 0
        %364 = vmatprep.subr.bf16.mxu0 0
        %365 = vmatpush2.bf16.msra.mxu0 0
        %366 = vmatprep.subr.bf16.mxu0 0
        %367 = vmatpush2.bf16.msra.mxu0 0
        %368 = vmatprep.subr.bf16.mxu0 0
        %369 = vmatpush2.bf16.msra.mxu0 0
        %370 = vmatprep.subr.bf16.mxu0 0
        %371 = vmatpush2.bf16.msra.mxu0 0
        %372 = vmatprep.subr.bf16.mxu0 0
        %373 = vmatpush2.bf16.msra.mxu0 0
        %374 = vmatprep.subr.bf16.mxu0 0
        %375 = vmatpush2.bf16.msra.mxu0 0
        %376 = vmatprep.mubr.bf16.mxu0 0
        %377 = vmatmul.mubr.bf16.gmra.mxu0 %v279
        %v378 = vpop.f32.mrf.mxu0
        %v379 = vadd.f32 0.0, %v378
        %v380 = vpop.f32.mrf.mxu0
        %v381 = vpop.f32.mrf.mxu0
        %v382 = vpop.f32.mrf.mxu0
        %383 = vdwg.mxu0
        %v384 = vpack.c.bf16 %v379, %v379
        %385 = vst [vmem:[#allocation2] sm:$0xf] %v384
        %v386 = vld [vmem:[%s2] sm:$0xf]
        %v387 = vld [vmem:[%s2 + $0x4] sm:$0xf]
        %v388 = vld [vmem:[%s2 + $0x8] sm:$0xf]
        %v389 = vld [vmem:[%s2 + $0xc] sm:$0xf]
        %v390 = vld [vmem:[%s2 + $0x10] sm:$0xf]
        %v391 = vld [vmem:[%s2 + $0x14] sm:$0xf]
        %v392 = vld [vmem:[%s2 + $0x18] sm:$0xf]
        %v393 = vld [vmem:[%s2 + $0x1c] sm:$0xf]
        %v394 = vld [vmem:[%s2 + $0x20] sm:$0xf]
        %v395 = vld [vmem:[%s2 + $0x24] sm:$0xf]
        %v396 = vld [vmem:[%s2 + $0x28] sm:$0xf]
        %v397 = vld [vmem:[%s2 + $0x2c] sm:$0xf]
        %v398 = vld [vmem:[%s2 + $0x30] sm:$0xf]
        %v399 = vld [vmem:[%s2 + $0x34] sm:$0xf]
        %v400 = vld [vmem:[%s2 + $0x38] sm:$0xf]
        %v401 = vld [vmem:[%s2 + $0x3c] sm:$0xf]
        %v418 = vunpack.c.l.b16 %v386
        %v419 = vunpack.c.l.b16 %v387
        %v420 = vunpack.c.l.b16 %v388
        %v421 = vunpack.c.l.b16 %v389
        %v422 = vunpack.c.l.b16 %v390
        %v423 = vunpack.c.l.b16 %v391
        %v424 = vunpack.c.l.b16 %v392
        %v425 = vunpack.c.l.b16 %v393
        %v426 = vunpack.c.l.b16 %v394
        %v427 = vunpack.c.l.b16 %v395
        %v428 = vunpack.c.l.b16 %v396
        %v429 = vunpack.c.l.b16 %v397
        %v430 = vunpack.c.l.b16 %v398
        %v431 = vunpack.c.l.b16 %v399
        %v432 = vunpack.c.l.b16 %v400
        %v433 = vunpack.c.l.b16 %v401
        %v434 = vpack.c.b16 %v419, %v418
        %v435 = vpack.c.b16 %v421, %v420
        %v436 = vpack.c.b16 %v423, %v422
        %v437 = vpack.c.b16 %v425, %v424
        %v438 = vpack.c.b16 %v427, %v426
        %v439 = vpack.c.b16 %v429, %v428
        %v440 = vpack.c.b16 %v431, %v430
        %v441 = vpack.c.b16 %v433, %v432
        %450 = vmatprep.subr.bf16.mxu0 0
        %451 = vmatpush1.bf16.msra.mxu0 %v441
        %452 = vmatprep.subr.bf16.mxu0 0
        %453 = vmatpush1.bf16.msra.mxu0 %v440
        %454 = vmatprep.subr.bf16.mxu0 0
        %455 = vmatpush1.bf16.msra.mxu0 %v439
        %456 = vmatprep.subr.bf16.mxu0 0
        %457 = vmatpush1.bf16.msra.mxu0 %v438
        %458 = vmatprep.subr.bf16.mxu0 0
        %459 = vmatpush1.bf16.msra.mxu0 %v437
        %460 = vmatprep.subr.bf16.mxu0 0
        %461 = vmatpush1.bf16.msra.mxu0 %v436
        %462 = vmatprep.subr.bf16.mxu0 0
        %463 = vmatpush1.bf16.msra.mxu0 %v435
        %464 = vmatprep.subr.bf16.mxu0 0
        %465 = vmatpush1.bf16.msra.mxu0 %v434
        %466 = vmatprep.subr.bf16.mxu0 0
        %467 = vmatpush2.bf16.msra.mxu0 0
        %468 = vmatprep.subr.bf16.mxu0 0
        %469 = vmatpush2.bf16.msra.mxu0 0
        %470 = vmatprep.subr.bf16.mxu0 0
        %471 = vmatpush2.bf16.msra.mxu0 0
        %472 = vmatprep.subr.bf16.mxu0 0
        %473 = vmatpush2.bf16.msra.mxu0 0
        %474 = vmatprep.subr.bf16.mxu0 0
        %475 = vmatpush2.bf16.msra.mxu0 0
        %476 = vmatprep.subr.bf16.mxu0 0
        %477 = vmatpush2.bf16.msra.mxu0 0
        %478 = vmatprep.subr.bf16.mxu0 0
        %479 = vmatpush2.bf16.msra.mxu0 0
        %480 = vmatprep.subr.bf16.mxu0 0
        %481 = vmatpush2.bf16.msra.mxu0 0
        %482 = vmatprep.mubr.bf16.mxu0 0
        %483 = vmatmul.mubr.bf16.gmra.mxu0 %v279
        %v484 = vpop.f32.mrf.mxu0
        %v485 = vadd.f32 0.0, %v484
        %v486 = vpop.f32.mrf.mxu0
        %v487 = vpop.f32.mrf.mxu0
        %v488 = vpop.f32.mrf.mxu0
        %489 = vdwg.mxu0
        %490 = vst [vmem:[#allocation3] sm:$0xff] %v485
        %s491 = sadd.s32 0, 1
        %s492 = smul.addr %s491, 4
        %s493 = scalar_lea.vmem %s250, %s492 [#allocation5]
        %v494 = vld [vmem:[%s493] sm:$0xf]
        %s495 = sadd.s32 0, 8
        %v496 = vld [vmem:[%s1] sm:$0xf]
        %v497 = vld [vmem:[%s1 + $0x4] sm:$0xf]
        %v498 = vld [vmem:[%s1 + $0x8] sm:$0xf]
        %v499 = vld [vmem:[%s1 + $0xc] sm:$0xf]
        %v500 = vld [vmem:[%s1 + $0x10] sm:$0xf]
        %v501 = vld [vmem:[%s1 + $0x14] sm:$0xf]
        %v502 = vld [vmem:[%s1 + $0x18] sm:$0xf]
        %v503 = vld [vmem:[%s1 + $0x1c] sm:$0xf]
        %v504 = vld [vmem:[%s1 + $0x20] sm:$0xf]
        %v505 = vld [vmem:[%s1 + $0x24] sm:$0xf]
        %v506 = vld [vmem:[%s1 + $0x28] sm:$0xf]
        %v507 = vld [vmem:[%s1 + $0x2c] sm:$0xf]
        %v508 = vld [vmem:[%s1 + $0x30] sm:$0xf]
        %v509 = vld [vmem:[%s1 + $0x34] sm:$0xf]
        %v510 = vld [vmem:[%s1 + $0x38] sm:$0xf]
        %v511 = vld [vmem:[%s1 + $0x3c] sm:$0xf]
        %v528 = vunpack.c.l.b16 %v496
        %v529 = vunpack.c.l.b16 %v497
        %v530 = vunpack.c.l.b16 %v498
        %v531 = vunpack.c.l.b16 %v499
        %v532 = vunpack.c.l.b16 %v500
        %v533 = vunpack.c.l.b16 %v501
        %v534 = vunpack.c.l.b16 %v502
        %v535 = vunpack.c.l.b16 %v503
        %v536 = vunpack.c.l.b16 %v504
        %v537 = vunpack.c.l.b16 %v505
        %v538 = vunpack.c.l.b16 %v506
        %v539 = vunpack.c.l.b16 %v507
        %v540 = vunpack.c.l.b16 %v508
        %v541 = vunpack.c.l.b16 %v509
        %v542 = vunpack.c.l.b16 %v510
        %v543 = vunpack.c.l.b16 %v511
        %v544 = vpack.c.b16 %v529, %v528
        %v545 = vpack.c.b16 %v531, %v530
        %v546 = vpack.c.b16 %v533, %v532
        %v547 = vpack.c.b16 %v535, %v534
        %v548 = vpack.c.b16 %v537, %v536
        %v549 = vpack.c.b16 %v539, %v538
        %v550 = vpack.c.b16 %v541, %v540
        %v551 = vpack.c.b16 %v543, %v542
        %560 = vmatprep.subr.bf16.mxu0 0
        %561 = vmatpush1.bf16.msra.mxu0 %v551
        %562 = vmatprep.subr.bf16.mxu0 0
        %563 = vmatpush1.bf16.msra.mxu0 %v550
        %564 = vmatprep.subr.bf16.mxu0 0
        %565 = vmatpush1.bf16.msra.mxu0 %v549
        %566 = vmatprep.subr.bf16.mxu0 0
        %567 = vmatpush1.bf16.msra.mxu0 %v548
        %568 = vmatprep.subr.bf16.mxu0 0
        %569 = vmatpush1.bf16.msra.mxu0 %v547
        %570 = vmatprep.subr.bf16.mxu0 0
        %571 = vmatpush1.bf16.msra.mxu0 %v546
        %572 = vmatprep.subr.bf16.mxu0 0
        %573 = vmatpush1.bf16.msra.mxu0 %v545
        %574 = vmatprep.subr.bf16.mxu0 0
        %575 = vmatpush1.bf16.msra.mxu0 %v544
        %576 = vmatprep.subr.bf16.mxu0 0
        %577 = vmatpush2.bf16.msra.mxu0 0
        %578 = vmatprep.subr.bf16.mxu0 0
        %579 = vmatpush2.bf16.msra.mxu0 0
        %580 = vmatprep.subr.bf16.mxu0 0
        %581 = vmatpush2.bf16.msra.mxu0 0
        %582 = vmatprep.subr.bf16.mxu0 0
        %583 = vmatpush2.bf16.msra.mxu0 0
        %584 = vmatprep.subr.bf16.mxu0 0
        %585 = vmatpush2.bf16.msra.mxu0 0
        %586 = vmatprep.subr.bf16.mxu0 0
        %587 = vmatpush2.bf16.msra.mxu0 0
        %588 = vmatprep.subr.bf16.mxu0 0
        %589 = vmatpush2.bf16.msra.mxu0 0
        %590 = vmatprep.subr.bf16.mxu0 0
        %591 = vmatpush2.bf16.msra.mxu0 0
        %592 = vmatprep.mubr.bf16.mxu0 0
        %593 = vmatmul.mubr.bf16.gmra.mxu0 %v494
        %v594 = vpop.f32.mrf.mxu0
        %v595 = vadd.f32 0.0, %v594
        %v596 = vpop.f32.mrf.mxu0
        %v597 = vpop.f32.mrf.mxu0
        %v598 = vpop.f32.mrf.mxu0
        %599 = vdwg.mxu0
        %v600 = vpack.c.bf16 %v595, %v595
        %s601 = sshra.s32 %s495, 3
        %s602 = sand.u32 %s495, 7
        %s603 = smul.addr %s601, 4
        %s604 = scalar_lea.vmem [#allocation2], %s603
        %605 = vst [vmem:[%s604] sm:$0xf] %v600
        %v606 = vld [vmem:[%s2] sm:$0xf]
        %v607 = vld [vmem:[%s2 + $0x4] sm:$0xf]
        %v608 = vld [vmem:[%s2 + $0x8] sm:$0xf]
        %v609 = vld [vmem:[%s2 + $0xc] sm:$0xf]
        %v610 = vld [vmem:[%s2 + $0x10] sm:$0xf]
        %v611 = vld [vmem:[%s2 + $0x14] sm:$0xf]
        %v612 = vld [vmem:[%s2 + $0x18] sm:$0xf]
        %v613 = vld [vmem:[%s2 + $0x1c] sm:$0xf]
        %v614 = vld [vmem:[%s2 + $0x20] sm:$0xf]
        %v615 = vld [vmem:[%s2 + $0x24] sm:$0xf]
        %v616 = vld [vmem:[%s2 + $0x28] sm:$0xf]
        %v617 = vld [vmem:[%s2 + $0x2c] sm:$0xf]
        %v618 = vld [vmem:[%s2 + $0x30] sm:$0xf]
        %v619 = vld [vmem:[%s2 + $0x34] sm:$0xf]
        %v620 = vld [vmem:[%s2 + $0x38] sm:$0xf]
        %v621 = vld [vmem:[%s2 + $0x3c] sm:$0xf]
        %v638 = vunpack.c.l.b16 %v606
        %v639 = vunpack.c.l.b16 %v607
        %v640 = vunpack.c.l.b16 %v608
        %v641 = vunpack.c.l.b16 %v609
        %v642 = vunpack.c.l.b16 %v610
        %v643 = vunpack.c.l.b16 %v611
        %v644 = vunpack.c.l.b16 %v612
        %v645 = vunpack.c.l.b16 %v613
        %v646 = vunpack.c.l.b16 %v614
        %v647 = vunpack.c.l.b16 %v615
        %v648 = vunpack.c.l.b16 %v616
        %v649 = vunpack.c.l.b16 %v617
        %v650 = vunpack.c.l.b16 %v618
        %v651 = vunpack.c.l.b16 %v619
        %v652 = vunpack.c.l.b16 %v620
        %v653 = vunpack.c.l.b16 %v621
        %v654 = vpack.c.b16 %v639, %v638
        %v655 = vpack.c.b16 %v641, %v640
        %v656 = vpack.c.b16 %v643, %v642
        %v657 = vpack.c.b16 %v645, %v644
        %v658 = vpack.c.b16 %v647, %v646
        %v659 = vpack.c.b16 %v649, %v648
        %v660 = vpack.c.b16 %v651, %v650
        %v661 = vpack.c.b16 %v653, %v652
        %670 = vmatprep.subr.bf16.mxu0 0
        %671 = vmatpush1.bf16.msra.mxu0 %v661
        %672 = vmatprep.subr.bf16.mxu0 0
        %673 = vmatpush1.bf16.msra.mxu0 %v660
        %674 = vmatprep.subr.bf16.mxu0 0
        %675 = vmatpush1.bf16.msra.mxu0 %v659
        %676 = vmatprep.subr.bf16.mxu0 0
        %677 = vmatpush1.bf16.msra.mxu0 %v658
        %678 = vmatprep.subr.bf16.mxu0 0
        %679 = vmatpush1.bf16.msra.mxu0 %v657
        %680 = vmatprep.subr.bf16.mxu0 0
        %681 = vmatpush1.bf16.msra.mxu0 %v656
        %682 = vmatprep.subr.bf16.mxu0 0
        %683 = vmatpush1.bf16.msra.mxu0 %v655
        %684 = vmatprep.subr.bf16.mxu0 0
        %685 = vmatpush1.bf16.msra.mxu0 %v654
        %686 = vmatprep.subr.bf16.mxu0 0
        %687 = vmatpush2.bf16.msra.mxu0 0
        %688 = vmatprep.subr.bf16.mxu0 0
        %689 = vmatpush2.bf16.msra.mxu0 0
        %690 = vmatprep.subr.bf16.mxu0 0
        %691 = vmatpush2.bf16.msra.mxu0 0
        %692 = vmatprep.subr.bf16.mxu0 0
        %693 = vmatpush2.bf16.msra.mxu0 0
        %694 = vmatprep.subr.bf16.mxu0 0
        %695 = vmatpush2.bf16.msra.mxu0 0
        %696 = vmatprep.subr.bf16.mxu0 0
        %697 = vmatpush2.bf16.msra.mxu0 0
        %698 = vmatprep.subr.bf16.mxu0 0
        %699 = vmatpush2.bf16.msra.mxu0 0
        %700 = vmatprep.subr.bf16.mxu0 0
        %701 = vmatpush2.bf16.msra.mxu0 0
        %702 = vmatprep.mubr.bf16.mxu0 0
        %703 = vmatmul.mubr.bf16.gmra.mxu0 %v494
        %v704 = vpop.f32.mrf.mxu0
        %v705 = vadd.f32 0.0, %v704
        %v706 = vpop.f32.mrf.mxu0
        %v707 = vpop.f32.mrf.mxu0
        %v708 = vpop.f32.mrf.mxu0
        %709 = vdwg.mxu0
        %s710 = scalar_lea.vmem [#allocation3], %s495
        %711 = vst [vmem:[%s710] sm:$0xff] %v705
        %s712 = sadd.s32 0, 2
        %s713 = smul.addr %s712, 4
        %s714 = scalar_lea.vmem %s250, %s713 [#allocation5]
        %v715 = vld [vmem:[%s714] sm:$0xf]
        %s716 = sadd.s32 0, 16
        %v717 = vld [vmem:[%s1] sm:$0xf]
        %v718 = vld [vmem:[%s1 + $0x4] sm:$0xf]
        %v719 = vld [vmem:[%s1 + $0x8] sm:$0xf]
        %v720 = vld [vmem:[%s1 + $0xc] sm:$0xf]
        %v721 = vld [vmem:[%s1 + $0x10] sm:$0xf]
        %v722 = vld [vmem:[%s1 + $0x14] sm:$0xf]
        %v723 = vld [vmem:[%s1 + $0x18] sm:$0xf]
        %v724 = vld [vmem:[%s1 + $0x1c] sm:$0xf]
        %v725 = vld [vmem:[%s1 + $0x20] sm:$0xf]
        %v726 = vld [vmem:[%s1 + $0x24] sm:$0xf]
        %v727 = vld [vmem:[%s1 + $0x28] sm:$0xf]
        %v728 = vld [vmem:[%s1 + $0x2c] sm:$0xf]
        %v729 = vld [vmem:[%s1 + $0x30] sm:$0xf]
        %v730 = vld [vmem:[%s1 + $0x34] sm:$0xf]
        %v731 = vld [vmem:[%s1 + $0x38] sm:$0xf]
        %v732 = vld [vmem:[%s1 + $0x3c] sm:$0xf]
        %v749 = vunpack.c.l.b16 %v717
        %v750 = vunpack.c.l.b16 %v718
        %v751 = vunpack.c.l.b16 %v719
        %v752 = vunpack.c.l.b16 %v720
        %v753 = vunpack.c.l.b16 %v721
        %v754 = vunpack.c.l.b16 %v722
        %v755 = vunpack.c.l.b16 %v723
        %v756 = vunpack.c.l.b16 %v724
        %v757 = vunpack.c.l.b16 %v725
        %v758 = vunpack.c.l.b16 %v726
        %v759 = vunpack.c.l.b16 %v727
        %v760 = vunpack.c.l.b16 %v728
        %v761 = vunpack.c.l.b16 %v729
        %v762 = vunpack.c.l.b16 %v730
        %v763 = vunpack.c.l.b16 %v731
        %v764 = vunpack.c.l.b16 %v732
        %v765 = vpack.c.b16 %v750, %v749
        %v766 = vpack.c.b16 %v752, %v751
        %v767 = vpack.c.b16 %v754, %v753
        %v768 = vpack.c.b16 %v756, %v755
        %v769 = vpack.c.b16 %v758, %v757
        %v770 = vpack.c.b16 %v760, %v759
        %v771 = vpack.c.b16 %v762, %v761
        %v772 = vpack.c.b16 %v764, %v763
        %781 = vmatprep.subr.bf16.mxu0 0
        %782 = vmatpush1.bf16.msra.mxu0 %v772
        %783 = vmatprep.subr.bf16.mxu0 0
        %784 = vmatpush1.bf16.msra.mxu0 %v771
        %785 = vmatprep.subr.bf16.mxu0 0
        %786 = vmatpush1.bf16.msra.mxu0 %v770
        %787 = vmatprep.subr.bf16.mxu0 0
        %788 = vmatpush1.bf16.msra.mxu0 %v769
        %789 = vmatprep.subr.bf16.mxu0 0
        %790 = vmatpush1.bf16.msra.mxu0 %v768
        %791 = vmatprep.subr.bf16.mxu0 0
        %792 = vmatpush1.bf16.msra.mxu0 %v767
        %793 = vmatprep.subr.bf16.mxu0 0
        %794 = vmatpush1.bf16.msra.mxu0 %v766
        %795 = vmatprep.subr.bf16.mxu0 0
        %796 = vmatpush1.bf16.msra.mxu0 %v765
        %797 = vmatprep.subr.bf16.mxu0 0
        %798 = vmatpush2.bf16.msra.mxu0 0
        %799 = vmatprep.subr.bf16.mxu0 0
        %800 = vmatpush2.bf16.msra.mxu0 0
        %801 = vmatprep.subr.bf16.mxu0 0
        %802 = vmatpush2.bf16.msra.mxu0 0
        %803 = vmatprep.subr.bf16.mxu0 0
        %804 = vmatpush2.bf16.msra.mxu0 0
        %805 = vmatprep.subr.bf16.mxu0 0
        %806 = vmatpush2.bf16.msra.mxu0 0
        %807 = vmatprep.subr.bf16.mxu0 0
        %808 = vmatpush2.bf16.msra.mxu0 0
        %809 = vmatprep.subr.bf16.mxu0 0
        %810 = vmatpush2.bf16.msra.mxu0 0
        %811 = vmatprep.subr.bf16.mxu0 0
        %812 = vmatpush2.bf16.msra.mxu0 0
        %813 = vmatprep.mubr.bf16.mxu0 0
        %814 = vmatmul.mubr.bf16.gmra.mxu0 %v715
        %v815 = vpop.f32.mrf.mxu0
        %v816 = vadd.f32 0.0, %v815
        %v817 = vpop.f32.mrf.mxu0
        %v818 = vpop.f32.mrf.mxu0
        %v819 = vpop.f32.mrf.mxu0
        %820 = vdwg.mxu0
        %v821 = vpack.c.bf16 %v816, %v816
        %s822 = sshra.s32 %s716, 3
        %s823 = sand.u32 %s716, 7
        %s824 = smul.addr %s822, 4
        %s825 = scalar_lea.vmem [#allocation2], %s824
        %826 = vst [vmem:[%s825] sm:$0xf] %v821
        %v827 = vld [vmem:[%s2] sm:$0xf]
        %v828 = vld [vmem:[%s2 + $0x4] sm:$0xf]
        %v829 = vld [vmem:[%s2 + $0x8] sm:$0xf]
        %v830 = vld [vmem:[%s2 + $0xc] sm:$0xf]
        %v831 = vld [vmem:[%s2 + $0x10] sm:$0xf]
        %v832 = vld [vmem:[%s2 + $0x14] sm:$0xf]
        %v833 = vld [vmem:[%s2 + $0x18] sm:$0xf]
        %v834 = vld [vmem:[%s2 + $0x1c] sm:$0xf]
        %v835 = vld [vmem:[%s2 + $0x20] sm:$0xf]
        %v836 = vld [vmem:[%s2 + $0x24] sm:$0xf]
        %v837 = vld [vmem:[%s2 + $0x28] sm:$0xf]
        %v838 = vld [vmem:[%s2 + $0x2c] sm:$0xf]
        %v839 = vld [vmem:[%s2 + $0x30] sm:$0xf]
        %v840 = vld [vmem:[%s2 + $0x34] sm:$0xf]
        %v841 = vld [vmem:[%s2 + $0x38] sm:$0xf]
        %v842 = vld [vmem:[%s2 + $0x3c] sm:$0xf]
        %v859 = vunpack.c.l.b16 %v827
        %v860 = vunpack.c.l.b16 %v828
        %v861 = vunpack.c.l.b16 %v829
        %v862 = vunpack.c.l.b16 %v830
        %v863 = vunpack.c.l.b16 %v831
        %v864 = vunpack.c.l.b16 %v832
        %v865 = vunpack.c.l.b16 %v833
        %v866 = vunpack.c.l.b16 %v834
        %v867 = vunpack.c.l.b16 %v835
        %v868 = vunpack.c.l.b16 %v836
        %v869 = vunpack.c.l.b16 %v837
        %v870 = vunpack.c.l.b16 %v838
        %v871 = vunpack.c.l.b16 %v839
        %v872 = vunpack.c.l.b16 %v840
        %v873 = vunpack.c.l.b16 %v841
        %v874 = vunpack.c.l.b16 %v842
        %v875 = vpack.c.b16 %v860, %v859
        %v876 = vpack.c.b16 %v862, %v861
        %v877 = vpack.c.b16 %v864, %v863
        %v878 = vpack.c.b16 %v866, %v865
        %v879 = vpack.c.b16 %v868, %v867
        %v880 = vpack.c.b16 %v870, %v869
        %v881 = vpack.c.b16 %v872, %v871
        %v882 = vpack.c.b16 %v874, %v873
        %891 = vmatprep.subr.bf16.mxu0 0
        %892 = vmatpush1.bf16.msra.mxu0 %v882
        %893 = vmatprep.subr.bf16.mxu0 0
        %894 = vmatpush1.bf16.msra.mxu0 %v881
        %895 = vmatprep.subr.bf16.mxu0 0
        %896 = vmatpush1.bf16.msra.mxu0 %v880
        %897 = vmatprep.subr.bf16.mxu0 0
        %898 = vmatpush1.bf16.msra.mxu0 %v879
        %899 = vmatprep.subr.bf16.mxu0 0
        %900 = vmatpush1.bf16.msra.mxu0 %v878
        %901 = vmatprep.subr.bf16.mxu0 0
        %902 = vmatpush1.bf16.msra.mxu0 %v877
        %903 = vmatprep.subr.bf16.mxu0 0
        %904 = vmatpush1.bf16.msra.mxu0 %v876
        %905 = vmatprep.subr.bf16.mxu0 0
        %906 = vmatpush1.bf16.msra.mxu0 %v875
        %907 = vmatprep.subr.bf16.mxu0 0
        %908 = vmatpush2.bf16.msra.mxu0 0
        %909 = vmatprep.subr.bf16.mxu0 0
        %910 = vmatpush2.bf16.msra.mxu0 0
        %911 = vmatprep.subr.bf16.mxu0 0
        %912 = vmatpush2.bf16.msra.mxu0 0
        %913 = vmatprep.subr.bf16.mxu0 0
        %914 = vmatpush2.bf16.msra.mxu0 0
        %915 = vmatprep.subr.bf16.mxu0 0
        %916 = vmatpush2.bf16.msra.mxu0 0
        %917 = vmatprep.subr.bf16.mxu0 0
        %918 = vmatpush2.bf16.msra.mxu0 0
        %919 = vmatprep.subr.bf16.mxu0 0
        %920 = vmatpush2.bf16.msra.mxu0 0
        %921 = vmatprep.subr.bf16.mxu0 0
        %922 = vmatpush2.bf16.msra.mxu0 0
        %923 = vmatprep.mubr.bf16.mxu0 0
        %924 = vmatmul.mubr.bf16.gmra.mxu0 %v715
        %v925 = vpop.f32.mrf.mxu0
        %v926 = vadd.f32 0.0, %v925
        %v927 = vpop.f32.mrf.mxu0
        %v928 = vpop.f32.mrf.mxu0
        %v929 = vpop.f32.mrf.mxu0
        %930 = vdwg.mxu0
        %s931 = scalar_lea.vmem [#allocation3], %s716
        %932 = vst [vmem:[%s931] sm:$0xff] %v926
        %s933 = sadd.s32 0, 3
        %s934 = smul.addr %s933, 4
        %s935 = scalar_lea.vmem %s250, %s934 [#allocation5]
        %v936 = vld [vmem:[%s935] sm:$0xf]
        %s937 = sadd.s32 0, 24
        %v938 = vld [vmem:[%s1] sm:$0xf]
        %v939 = vld [vmem:[%s1 + $0x4] sm:$0xf]
        %v940 = vld [vmem:[%s1 + $0x8] sm:$0xf]
        %v941 = vld [vmem:[%s1 + $0xc] sm:$0xf]
        %v942 = vld [vmem:[%s1 + $0x10] sm:$0xf]
        %v943 = vld [vmem:[%s1 + $0x14] sm:$0xf]
        %v944 = vld [vmem:[%s1 + $0x18] sm:$0xf]
        %v945 = vld [vmem:[%s1 + $0x1c] sm:$0xf]
        %v946 = vld [vmem:[%s1 + $0x20] sm:$0xf]
        %v947 = vld [vmem:[%s1 + $0x24] sm:$0xf]
        %v948 = vld [vmem:[%s1 + $0x28] sm:$0xf]
        %v949 = vld [vmem:[%s1 + $0x2c] sm:$0xf]
        %v950 = vld [vmem:[%s1 + $0x30] sm:$0xf]
        %v951 = vld [vmem:[%s1 + $0x34] sm:$0xf]
        %v952 = vld [vmem:[%s1 + $0x38] sm:$0xf]
        %v953 = vld [vmem:[%s1 + $0x3c] sm:$0xf]
        %v970 = vunpack.c.l.b16 %v938
        %v971 = vunpack.c.l.b16 %v939
        %v972 = vunpack.c.l.b16 %v940
        %v973 = vunpack.c.l.b16 %v941
        %v974 = vunpack.c.l.b16 %v942
        %v975 = vunpack.c.l.b16 %v943
        %v976 = vunpack.c.l.b16 %v944
        %v977 = vunpack.c.l.b16 %v945
        %v978 = vunpack.c.l.b16 %v946
        %v979 = vunpack.c.l.b16 %v947
        %v980 = vunpack.c.l.b16 %v948
        %v981 = vunpack.c.l.b16 %v949
        %v982 = vunpack.c.l.b16 %v950
        %v983 = vunpack.c.l.b16 %v951
        %v984 = vunpack.c.l.b16 %v952
        %v985 = vunpack.c.l.b16 %v953
        %v986 = vpack.c.b16 %v971, %v970
        %v987 = vpack.c.b16 %v973, %v972
        %v988 = vpack.c.b16 %v975, %v974
        %v989 = vpack.c.b16 %v977, %v976
        %v990 = vpack.c.b16 %v979, %v978
        %v991 = vpack.c.b16 %v981, %v980
        %v992 = vpack.c.b16 %v983, %v982
        %v993 = vpack.c.b16 %v985, %v984
        %1002 = vmatprep.subr.bf16.mxu0 0
        %1003 = vmatpush1.bf16.msra.mxu0 %v993
        %1004 = vmatprep.subr.bf16.mxu0 0
        %1005 = vmatpush1.bf16.msra.mxu0 %v992
        %1006 = vmatprep.subr.bf16.mxu0 0
        %1007 = vmatpush1.bf16.msra.mxu0 %v991
        %1008 = vmatprep.subr.bf16.mxu0 0
        %1009 = vmatpush1.bf16.msra.mxu0 %v990
        %1010 = vmatprep.subr.bf16.mxu0 0
        %1011 = vmatpush1.bf16.msra.mxu0 %v989
        %1012 = vmatprep.subr.bf16.mxu0 0
        %1013 = vmatpush1.bf16.msra.mxu0 %v988
        %1014 = vmatprep.subr.bf16.mxu0 0
        %1015 = vmatpush1.bf16.msra.mxu0 %v987
        %1016 = vmatprep.subr.bf16.mxu0 0
        %1017 = vmatpush1.bf16.msra.mxu0 %v986
        %1018 = vmatprep.subr.bf16.mxu0 0
        %1019 = vmatpush2.bf16.msra.mxu0 0
        %1020 = vmatprep.subr.bf16.mxu0 0
        %1021 = vmatpush2.bf16.msra.mxu0 0
        %1022 = vmatprep.subr.bf16.mxu0 0
        %1023 = vmatpush2.bf16.msra.mxu0 0
        %1024 = vmatprep.subr.bf16.mxu0 0
        %1025 = vmatpush2.bf16.msra.mxu0 0
        %1026 = vmatprep.subr.bf16.mxu0 0
        %1027 = vmatpush2.bf16.msra.mxu0 0
        %1028 = vmatprep.subr.bf16.mxu0 0
        %1029 = vmatpush2.bf16.msra.mxu0 0
        %1030 = vmatprep.subr.bf16.mxu0 0
        %1031 = vmatpush2.bf16.msra.mxu0 0
        %1032 = vmatprep.subr.bf16.mxu0 0
        %1033 = vmatpush2.bf16.msra.mxu0 0
        %1034 = vmatprep.mubr.bf16.mxu0 0
        %1035 = vmatmul.mubr.bf16.gmra.mxu0 %v936
        %v1036 = vpop.f32.mrf.mxu0
        %v1037 = vadd.f32 0.0, %v1036
        %v1038 = vpop.f32.mrf.mxu0
        %v1039 = vpop.f32.mrf.mxu0
        %v1040 = vpop.f32.mrf.mxu0
        %1041 = vdwg.mxu0
        %v1042 = vpack.c.bf16 %v1037, %v1037
        %s1043 = sshra.s32 %s937, 3
        %s1044 = sand.u32 %s937, 7
        %s1045 = smul.addr %s1043, 4
        %s1046 = scalar_lea.vmem [#allocation2], %s1045
        %1047 = vst [vmem:[%s1046] sm:$0xf] %v1042
        %v1048 = vld [vmem:[%s2] sm:$0xf]
        %v1049 = vld [vmem:[%s2 + $0x4] sm:$0xf]
        %v1050 = vld [vmem:[%s2 + $0x8] sm:$0xf]
        %v1051 = vld [vmem:[%s2 + $0xc] sm:$0xf]
        %v1052 = vld [vmem:[%s2 + $0x10] sm:$0xf]
        %v1053 = vld [vmem:[%s2 + $0x14] sm:$0xf]
        %v1054 = vld [vmem:[%s2 + $0x18] sm:$0xf]
        %v1055 = vld [vmem:[%s2 + $0x1c] sm:$0xf]
        %v1056 = vld [vmem:[%s2 + $0x20] sm:$0xf]
        %v1057 = vld [vmem:[%s2 + $0x24] sm:$0xf]
        %v1058 = vld [vmem:[%s2 + $0x28] sm:$0xf]
        %v1059 = vld [vmem:[%s2 + $0x2c] sm:$0xf]
        %v1060 = vld [vmem:[%s2 + $0x30] sm:$0xf]
        %v1061 = vld [vmem:[%s2 + $0x34] sm:$0xf]
        %v1062 = vld [vmem:[%s2 + $0x38] sm:$0xf]
        %v1063 = vld [vmem:[%s2 + $0x3c] sm:$0xf]
        %v1080 = vunpack.c.l.b16 %v1048
        %v1081 = vunpack.c.l.b16 %v1049
        %v1082 = vunpack.c.l.b16 %v1050
        %v1083 = vunpack.c.l.b16 %v1051
        %v1084 = vunpack.c.l.b16 %v1052
        %v1085 = vunpack.c.l.b16 %v1053
        %v1086 = vunpack.c.l.b16 %v1054
        %v1087 = vunpack.c.l.b16 %v1055
        %v1088 = vunpack.c.l.b16 %v1056
        %v1089 = vunpack.c.l.b16 %v1057
        %v1090 = vunpack.c.l.b16 %v1058
        %v1091 = vunpack.c.l.b16 %v1059
        %v1092 = vunpack.c.l.b16 %v1060
        %v1093 = vunpack.c.l.b16 %v1061
        %v1094 = vunpack.c.l.b16 %v1062
        %v1095 = vunpack.c.l.b16 %v1063
        %v1096 = vpack.c.b16 %v1081, %v1080
        %v1097 = vpack.c.b16 %v1083, %v1082
        %v1098 = vpack.c.b16 %v1085, %v1084
        %v1099 = vpack.c.b16 %v1087, %v1086
        %v1100 = vpack.c.b16 %v1089, %v1088
        %v1101 = vpack.c.b16 %v1091, %v1090
        %v1102 = vpack.c.b16 %v1093, %v1092
        %v1103 = vpack.c.b16 %v1095, %v1094
        %1112 = vmatprep.subr.bf16.mxu0 0
        %1113 = vmatpush1.bf16.msra.mxu0 %v1103
        %1114 = vmatprep.subr.bf16.mxu0 0
        %1115 = vmatpush1.bf16.msra.mxu0 %v1102
        %1116 = vmatprep.subr.bf16.mxu0 0
        %1117 = vmatpush1.bf16.msra.mxu0 %v1101
        %1118 = vmatprep.subr.bf16.mxu0 0
        %1119 = vmatpush1.bf16.msra.mxu0 %v1100
        %1120 = vmatprep.subr.bf16.mxu0 0
        %1121 = vmatpush1.bf16.msra.mxu0 %v1099
        %1122 = vmatprep.subr.bf16.mxu0 0
        %1123 = vmatpush1.bf16.msra.mxu0 %v1098
        %1124 = vmatprep.subr.bf16.mxu0 0
        %1125 = vmatpush1.bf16.msra.mxu0 %v1097
        %1126 = vmatprep.subr.bf16.mxu0 0
        %1127 = vmatpush1.bf16.msra.mxu0 %v1096
        %1128 = vmatprep.subr.bf16.mxu0 0
        %1129 = vmatpush2.bf16.msra.mxu0 0
        %1130 = vmatprep.subr.bf16.mxu0 0
        %1131 = vmatpush2.bf16.msra.mxu0 0
        %1132 = vmatprep.subr.bf16.mxu0 0
        %1133 = vmatpush2.bf16.msra.mxu0 0
        %1134 = vmatprep.subr.bf16.mxu0 0
        %1135 = vmatpush2.bf16.msra.mxu0 0
        %1136 = vmatprep.subr.bf16.mxu0 0
        %1137 = vmatpush2.bf16.msra.mxu0 0
        %1138 = vmatprep.subr.bf16.mxu0 0
        %1139 = vmatpush2.bf16.msra.mxu0 0
        %1140 = vmatprep.subr.bf16.mxu0 0
        %1141 = vmatpush2.bf16.msra.mxu0 0
        %1142 = vmatprep.subr.bf16.mxu0 0
        %1143 = vmatpush2.bf16.msra.mxu0 0
        %1144 = vmatprep.mubr.bf16.mxu0 0
        %1145 = vmatmul.mubr.bf16.gmra.mxu0 %v936
        %v1146 = vpop.f32.mrf.mxu0
        %v1147 = vadd.f32 0.0, %v1146
        %v1148 = vpop.f32.mrf.mxu0
        %v1149 = vpop.f32.mrf.mxu0
        %v1150 = vpop.f32.mrf.mxu0
        %1151 = vdwg.mxu0
        %s1152 = scalar_lea.vmem [#allocation3], %s937
        %1153 = vst [vmem:[%s1152] sm:$0xff] %v1147
        %v1154 = vld [vmem:[#allocation3] sm:$0xff]
        %v1155 = vld [vmem:[%s710] sm:$0xff]
        %v1156 = vmax.f32 %v1154, %v1155
        %v1157 = vld [vmem:[%s931] sm:$0xff]
        %v1158 = vmax.f32 %v1156, %v1157
        %v1159 = vld [vmem:[%s1152] sm:$0xff]
        %v1160 = vmax.f32 %v1158, %v1159
        %v1161 = vsub.f32 %v1154, %v1160
        %v1162 = vmul.f32 %v1161, 1.442695
        %v1163 = vpow.pop %v1162
        %v1164 = vadd.f32 %v1163, 0.0
        %v1165 = vsub.f32 %v1155, %v1160
        %v1166 = vmul.f32 %v1165, 1.442695
        %v1167 = vpow.pop %v1166
        %v1168 = vadd.f32 %v1164, %v1167
        %v1169 = vsub.f32 %v1157, %v1160
        %v1170 = vmul.f32 %v1169, 1.442695
        %v1171 = vpow.pop %v1170
        %v1172 = vadd.f32 %v1168, %v1171
        %v1173 = vsub.f32 %v1159, %v1160
        %v1174 = vmul.f32 %v1173, 1.442695
        %v1175 = vpow.pop %v1174
        %v1176 = vadd.f32 %v1172, %v1175
        %v1177 = vrcp.pop %v1176
        %v1178 = vmul.f32 %v1163, %v1177
        %v1179 = vld [vmem:[#allocation2] sm:$0xf]
        %1181 = vrot.lane.b32.xlu0 %v1178, 16
        %v1182 = vpop.permute.xlu0 %1181
        %1184 = vrot.lane.b32.xlu0 %v1178, 32
        %v1185 = vpop.permute.xlu0 %1184
        %1187 = vrot.lane.b32.xlu0 %v1178, 48
        %v1188 = vpop.permute.xlu0 %1187
        %1190 = vrot.lane.b32.xlu0 %v1178, 64
        %v1191 = vpop.permute.xlu0 %1190
        %1193 = vrot.lane.b32.xlu0 %v1178, 80
        %v1194 = vpop.permute.xlu0 %1193
        %1196 = vrot.lane.b32.xlu0 %v1178, 96
        %v1197 = vpop.permute.xlu0 %1196
        %1199 = vrot.lane.b32.xlu0 %v1178, 112
        %v1200 = vpop.permute.xlu0 %1199
        %vm1202 = vcmask 130048
        %v1203 = vsel %vm1202, %v1178, %v1182
        %vm1204 = vcmask 261120
        %v1205 = vsel %vm1204, %v1203, %v1185
        %vm1206 = vcmask 392192
        %v1207 = vsel %vm1206, %v1205, %v1188
        %vm1208 = vcmask 523264
        %v1209 = vsel %vm1208, %v1207, %v1191
        %vm1210 = vcmask 654336
        %v1211 = vsel %vm1210, %v1209, %v1194
        %vm1212 = vcmask 785408
        %v1213 = vsel %vm1212, %v1211, %v1197
        %vm1214 = vcmask 916480
        %v1215 = vsel %vm1214, %v1213, %v1200
        %v1216 = vunpack.c.l.bf16 %v1179
        %v1217 = vmul.f32 %v1215, %v1216
        %v1218 = vadd.f32 %v1217, 0.0
        %v1219 = vmul.f32 %v1167, %v1177
        %v1220 = vld [vmem:[%s604] sm:$0xf]
        %1222 = vrot.lane.b32.xlu0 %v1219, 16
        %v1223 = vpop.permute.xlu0 %1222
        %1225 = vrot.lane.b32.xlu0 %v1219, 32
        %v1226 = vpop.permute.xlu0 %1225
        %1228 = vrot.lane.b32.xlu0 %v1219, 48
        %v1229 = vpop.permute.xlu0 %1228
        %1231 = vrot.lane.b32.xlu0 %v1219, 64
        %v1232 = vpop.permute.xlu0 %1231
        %1234 = vrot.lane.b32.xlu0 %v1219, 80
        %v1235 = vpop.permute.xlu0 %1234
        %1237 = vrot.lane.b32.xlu0 %v1219, 96
        %v1238 = vpop.permute.xlu0 %1237
        %1240 = vrot.lane.b32.xlu0 %v1219, 112
        %v1241 = vpop.permute.xlu0 %1240
        %v1243 = vsel %vm1202, %v1219, %v1223
        %v1244 = vsel %vm1204, %v1243, %v1226
        %v1245 = vsel %vm1206, %v1244, %v1229
        %v1246 = vsel %vm1208, %v1245, %v1232
        %v1247 = vsel %vm1210, %v1246, %v1235
        %v1248 = vsel %vm1212, %v1247, %v1238
        %v1249 = vsel %vm1214, %v1248, %v1241
        %v1250 = vunpack.c.l.bf16 %v1220
        %v1251 = vmul.f32 %v1249, %v1250
        %v1252 = vadd.f32 %v1218, %v1251
        %v1253 = vmul.f32 %v1171, %v1177
        %v1254 = vld [vmem:[%s825] sm:$0xf]
        %1256 = vrot.lane.b32.xlu0 %v1253, 16
        %v1257 = vpop.permute.xlu0 %1256
        %1259 = vrot.lane.b32.xlu0 %v1253, 32
        %v1260 = vpop.permute.xlu0 %1259
        %1262 = vrot.lane.b32.xlu0 %v1253, 48
        %v1263 = vpop.permute.xlu0 %1262
        %1265 = vrot.lane.b32.xlu0 %v1253, 64
        %v1266 = vpop.permute.xlu0 %1265
        %1268 = vrot.lane.b32.xlu0 %v1253, 80
        %v1269 = vpop.permute.xlu0 %1268
        %1271 = vrot.lane.b32.xlu0 %v1253, 96
        %v1272 = vpop.permute.xlu0 %1271
        %1274 = vrot.lane.b32.xlu0 %v1253, 112
        %v1275 = vpop.permute.xlu0 %1274
        %v1277 = vsel %vm1202, %v1253, %v1257
        %v1278 = vsel %vm1204, %v1277, %v1260
        %v1279 = vsel %vm1206, %v1278, %v1263
        %v1280 = vsel %vm1208, %v1279, %v1266
        %v1281 = vsel %vm1210, %v1280, %v1269
        %v1282 = vsel %vm1212, %v1281, %v1272
        %v1283 = vsel %vm1214, %v1282, %v1275
        %v1284 = vunpack.c.l.bf16 %v1254
        %v1285 = vmul.f32 %v1283, %v1284
        %v1286 = vadd.f32 %v1252, %v1285
        %v1287 = vmul.f32 %v1175, %v1177
        %v1288 = vld [vmem:[%s1046] sm:$0xf]
        %1290 = vrot.lane.b32.xlu0 %v1287, 16
        %v1291 = vpop.permute.xlu0 %1290
        %1293 = vrot.lane.b32.xlu0 %v1287, 32
        %v1294 = vpop.permute.xlu0 %1293
        %1296 = vrot.lane.b32.xlu0 %v1287, 48
        %v1297 = vpop.permute.xlu0 %1296
        %1299 = vrot.lane.b32.xlu0 %v1287, 64
        %v1300 = vpop.permute.xlu0 %1299
        %1302 = vrot.lane.b32.xlu0 %v1287, 80
        %v1303 = vpop.permute.xlu0 %1302
        %1305 = vrot.lane.b32.xlu0 %v1287, 96
        %v1306 = vpop.permute.xlu0 %1305
        %1308 = vrot.lane.b32.xlu0 %v1287, 112
        %v1309 = vpop.permute.xlu0 %1308
        %v1311 = vsel %vm1202, %v1287, %v1291
        %v1312 = vsel %vm1204, %v1311, %v1294
        %v1313 = vsel %vm1206, %v1312, %v1297
        %v1314 = vsel %vm1208, %v1313, %v1300
        %v1315 = vsel %vm1210, %v1314, %v1303
        %v1316 = vsel %vm1212, %v1315, %v1306
        %v1317 = vsel %vm1214, %v1316, %v1309
        %v1318 = vunpack.c.l.bf16 %v1288
        %v1319 = vmul.f32 %v1317, %v1318
        %v1320 = vadd.f32 %v1286, %v1319
        %v1321 = vpack.c.bf16 %v1320, %v1320
        %v1322 = vld [vmem:[%s3] sm:$0xf]
        %v1323 = vld [vmem:[%s3 + $0x4] sm:$0xf]
        %v1324 = vld [vmem:[%s3 + $0x8] sm:$0xf]
        %v1325 = vld [vmem:[%s3 + $0xc] sm:$0xf]
        %v1326 = vld [vmem:[%s3 + $0x10] sm:$0xf]
        %v1327 = vld [vmem:[%s3 + $0x14] sm:$0xf]
        %v1328 = vld [vmem:[%s3 + $0x18] sm:$0xf]
        %v1329 = vld [vmem:[%s3 + $0x1c] sm:$0xf]
        %v1330 = vld [vmem:[%s3 + $0x20] sm:$0xf]
        %v1331 = vld [vmem:[%s3 + $0x24] sm:$0xf]
        %v1332 = vld [vmem:[%s3 + $0x28] sm:$0xf]
        %v1333 = vld [vmem:[%s3 + $0x2c] sm:$0xf]
        %v1334 = vld [vmem:[%s3 + $0x30] sm:$0xf]
        %v1335 = vld [vmem:[%s3 + $0x34] sm:$0xf]
        %v1336 = vld [vmem:[%s3 + $0x38] sm:$0xf]
        %v1337 = vld [vmem:[%s3 + $0x3c] sm:$0xf]
        %v1338 = vld [vmem:[%s4] sm:$0x1]
        %v1340 = vlaneseq
        %v1341 = vshrl.u32 %v1340, 7
        %v1342 = vsub.s32 0, %v1341
        %v1343 = vrot.slane %v1338, %v1342
        %v1361 = vunpack.c.l.b16 %v1322
        %v1362 = vunpack.c.l.b16 %v1323
        %v1363 = vunpack.c.l.b16 %v1324
        %v1364 = vunpack.c.l.b16 %v1325
        %v1365 = vunpack.c.l.b16 %v1326
        %v1366 = vunpack.c.l.b16 %v1327
        %v1367 = vunpack.c.l.b16 %v1328
        %v1368 = vunpack.c.l.b16 %v1329
        %v1369 = vunpack.c.l.b16 %v1330
        %v1370 = vunpack.c.l.b16 %v1331
        %v1371 = vunpack.c.l.b16 %v1332
        %v1372 = vunpack.c.l.b16 %v1333
        %v1373 = vunpack.c.l.b16 %v1334
        %v1374 = vunpack.c.l.b16 %v1335
        %v1375 = vunpack.c.l.b16 %v1336
        %v1376 = vunpack.c.l.b16 %v1337
        %v1377 = vpack.c.b16 %v1362, %v1361
        %v1378 = vpack.c.b16 %v1364, %v1363
        %v1379 = vpack.c.b16 %v1366, %v1365
        %v1380 = vpack.c.b16 %v1368, %v1367
        %v1381 = vpack.c.b16 %v1370, %v1369
        %v1382 = vpack.c.b16 %v1372, %v1371
        %v1383 = vpack.c.b16 %v1374, %v1373
        %v1384 = vpack.c.b16 %v1376, %v1375
        %1393 = vmatprep.subr.bf16.mxu0 0
        %1394 = vmatpush1.bf16.msra.mxu0 %v1384
        %1395 = vmatprep.subr.bf16.mxu0 0
        %1396 = vmatpush1.bf16.msra.mxu0 %v1383
        %1397 = vmatprep.subr.bf16.mxu0 0
        %1398 = vmatpush1.bf16.msra.mxu0 %v1382
        %1399 = vmatprep.subr.bf16.mxu0 0
        %1400 = vmatpush1.bf16.msra.mxu0 %v1381
        %1401 = vmatprep.subr.bf16.mxu0 0
        %1402 = vmatpush1.bf16.msra.mxu0 %v1380
        %1403 = vmatprep.subr.bf16.mxu0 0
        %1404 = vmatpush1.bf16.msra.mxu0 %v1379
        %1405 = vmatprep.subr.bf16.mxu0 0
        %1406 = vmatpush1.bf16.msra.mxu0 %v1378
        %1407 = vmatprep.subr.bf16.mxu0 0
        %1408 = vmatpush1.bf16.msra.mxu0 %v1377
        %1409 = vmatprep.subr.bf16.mxu0 0
        %1410 = vmatpush2.bf16.msra.mxu0 0
        %1411 = vmatprep.subr.bf16.mxu0 0
        %1412 = vmatpush2.bf16.msra.mxu0 0
        %1413 = vmatprep.subr.bf16.mxu0 0
        %1414 = vmatpush2.bf16.msra.mxu0 0
        %1415 = vmatprep.subr.bf16.mxu0 0
        %1416 = vmatpush2.bf16.msra.mxu0 0
        %1417 = vmatprep.subr.bf16.mxu0 0
        %1418 = vmatpush2.bf16.msra.mxu0 0
        %1419 = vmatprep.subr.bf16.mxu0 0
        %1420 = vmatpush2.bf16.msra.mxu0 0
        %1421 = vmatprep.subr.bf16.mxu0 0
        %1422 = vmatpush2.bf16.msra.mxu0 0
        %1423 = vmatprep.subr.bf16.mxu0 0
        %1424 = vmatpush2.bf16.msra.mxu0 0
        %1425 = vmatprep.mubr.bf16.mxu0 0
        %1426 = vmatmul.mubr.bf16.gmra.mxu0 %v1321
        %v1427 = vpop.f32.mrf.mxu0
        %v1428 = vadd.f32 %v1343, %v1427
        %v1429 = vpop.f32.mrf.mxu0
        %v1430 = vpop.f32.mrf.mxu0
        %v1431 = vpop.f32.mrf.mxu0
        %1432 = vdwg.mxu0
        %1433 = vst [vmem:[%s277] sm:$0xff] %v1428
        %p1434 = scmp.lt.s32.totalorder %s16, 3
        %s1435 = scalar_select %p1434, %s16, 3
        %s1436 = smul.addr %s1435, 8
        %s1437 = scalar_lea.vmem %s5, %s1436
        // Predicated region
        $region82: #{attn_downsample.1} parent=76 // pred_check
          %p1438 = pneg %p144
        $region83: #{attn_downsample.1} parent=76 // pred_check_branch
          %1440 = sbr.rel (%p1438) target = $region85
        $region84: #{attn_downsample.1} parent=76 // pred_region
          _
        $region85: #{attn_downsample.1} parent=76 // pred_fallthru
          _
      $region77: #{attn_downsample.1} parent=5 // pred_fallthru
        _
      %p1441 = scmp.le.s32.totalorder 2, %s11
      // Predicated region
      $region86: #{attn_downsample.1} parent=5 // pred_check
        %p1442 = pneg %p1441
      $region87: #{attn_downsample.1} parent=5 // pred_check_branch
        %1444 = sbr.rel (%p1442) target = $region89
      $region88: #{attn_downsample.1} parent=5 // pred_region
        %s1445 = ssub.s32 %s11, 2
        // Predicated region
        $region90: #{attn_downsample.1} parent=88 // pred_check
          %p1446 = pneg %p150
        $region91: #{attn_downsample.1} parent=88 // pred_check_branch
          %1448 = sbr.rel (%p1446) target = $region93
        $region92: #{attn_downsample.1} parent=88 // pred_region
          %p1449 = scmp.lt.s32.totalorder %s17, 3
          %s1450 = scalar_select %p1449, %s17, 3
          %s1451 = smul.addr %s1450, 8
          %s1452 = scalar_lea.vmem %s5, %s1451
        $region93: #{attn_downsample.1} parent=88 // pred_fallthru
          _
      $region89: #{attn_downsample.1} parent=5 // pred_fallthru
        _
    $region6: #{attn_downsample.1} parent=1 // loop_footer
      %s15 = sadd.s32 1, %s11
    $region7: #{attn_downsample.1} parent=1 // loop_footer_branch
      %10 = sbr.rel target = $region3
    $region8: #{attn_downsample.1} parent=1 // loop_exit
      _

</llo_original>
